<compile_context>
chip_gen: v7x
topology: tpu7x:2x2x1
jax: 0.10.0
libtpu: 0.0.40
codegen_flags: <defaults>
</compile_context>

<pallas_src>
import jax
import jax.numpy as jnp
from jax.experimental import pallas as pl
from jax.experimental.pallas import tpu as pltpu

EPS = 1e-5  # InstanceNorm2d default eps


def _round_up(x, m):
    return ((x + m - 1) // m) * m


def block_forward(x, conv_w, gamma, beta, alpha):
    """x: (N, C_in, H, W) NCHW f32, conv_w: (C_out, C_in, 4, 4),
    gamma/beta: (C_out,), alpha: scalar.  Returns (N, C_out, H//2, W//2) f32."""
    N, C_in, H, W = x.shape
    C_out = conv_w.shape[0]
    assert H % 2 == 0 and W % 2 == 0, "4x4/s2/p1 conv path assumes even H, W"

    Ho, Wo = H // 2, W // 2              # conv output spatial dims
    Hh, Wh = Ho + 1, Wo + 1              # per-phase grid incl. +1 halo row/col
    Fh = Hh * Wh                         # flat per-phase grid length
    P = Ho * Wo                          # number of valid output positions
    L = _round_up(Fh, 128)               # lane-dense compute/output length
    Fpad = _round_up(L + Wh + 1, 128)    # input flat length (room for tap shift)

    # ---- wrapper prep: reflect pad + 2x2 space-to-depth (no im2col) ----
    xp = jnp.pad(x, ((0, 0), (0, 0), (1, 1), (1, 1)), mode="reflect")
    phases = [xp[:, :, pr::2, pc::2] for pr in range(2) for pc in range(2)]
    xs = jnp.stack(phases, axis=1)                     # (N, 4, C_in, Hh, Wh)
    xsf = xs.reshape(N, 4, C_in, Fh).astype(jnp.bfloat16)
    xsf = jnp.pad(xsf, ((0, 0), (0, 0), (0, 0), (0, Fpad - Fh)))

    # Tap weights ordered (pr, pc, di, dj); kernel tap (i, j) = (2*di+pr, 2*dj+pc).
    taps = []        # (phase index, flat shift) per tap
    w_list = []
    for pr in range(2):
        for pc in range(2):
            for di in range(2):
                for dj in range(2):
                    taps.append((pr * 2 + pc, di * Wh + dj))
                    w_list.append(conv_w[:, :, 2 * di + pr, 2 * dj + pc])
    w_taps = jnp.stack(w_list, axis=0).astype(jnp.bfloat16)   # (16, C_out, C_in)

    # Validity mask over the L-long flat grid (crops halo row/col + lane pad).
    f = jnp.arange(L, dtype=jnp.int32)
    valid = ((f % Wh) < Wo) & ((f // Wh) < Ho)
    mask = valid.astype(jnp.float32).reshape(1, L)

    gamma2 = gamma.reshape(C_out, 1).astype(jnp.float32)
    beta2 = beta.reshape(C_out, 1).astype(jnp.float32)
    alpha1 = jnp.asarray(alpha, jnp.float32).reshape(1)

    inv_p = 1.0 / P  # python float constant, folded into the kernel

    def kernel(x_ref, w_ref, mask_ref, gamma_ref, beta_ref, alpha_ref, o_ref):
        # x_ref:  (4, C_in, Fpad) bf16   phase-split, flat-spatial input
        # w_ref:  (16, C_out, C_in) bf16 per-tap weights
        # mask:   (1, L) f32             1.0 at valid output positions
        # gamma/beta: (C_out, 1) f32
        # alpha:  (1,) f32 in SMEM
        # o_ref:  (C_out, L) f32
        acc = None
        for p in range(4):
            phase = x_ref[p]                                # (C_in, Fpad) bf16
            for t_local in range(4):
                t = p * 4 + t_local
                shift = taps[t][1]
                slab = phase[:, shift:shift + L]            # (C_in, L) bf16
                d = jnp.dot(w_ref[t], slab,
                            preferred_element_type=jnp.float32)  # (C_out, L)
                acc = d if acc is None else acc + d

        # InstanceNorm2d stats over the P valid positions (two-pass, f32).
        m = mask_ref[...]                                   # (1, L)
        mean = jnp.sum(acc * m, axis=1, keepdims=True) * inv_p      # (C_out, 1)
        cen = (acc - mean) * m
        var = jnp.sum(cen * cen, axis=1, keepdims=True) * inv_p

        # Folded affine: y*scale + (beta - mean*scale).
        scale = gamma_ref[...] * jax.lax.rsqrt(var + EPS)
        shift_c = beta_ref[...] - mean * scale
        y = acc * scale + shift_c

        # PReLU with a single shared slope from SMEM.
        a = alpha_ref[0]
        o_ref[...] = jnp.where(y >= 0.0, y, a * y)

    out_pad = pl.pallas_call(
        kernel,
        out_shape=jax.ShapeDtypeStruct((N, C_out, L), jnp.float32),
        grid_spec=pltpu.PrefetchScalarGridSpec(
            num_scalar_prefetch=0,
            grid=(N,),
            in_specs=[
                pl.BlockSpec((None, 4, C_in, Fpad), lambda n: (n, 0, 0, 0)),
                pl.BlockSpec((16, C_out, C_in), lambda n: (0, 0, 0)),
                pl.BlockSpec((1, L), lambda n: (0, 0)),
                pl.BlockSpec((C_out, 1), lambda n: (0, 0)),
                pl.BlockSpec((C_out, 1), lambda n: (0, 0)),
                pl.BlockSpec(memory_space=pltpu.MemorySpace.SMEM),
            ],
            out_specs=pl.BlockSpec((None, C_out, L), lambda n: (n, 0, 0)),
        ),
        compiler_params=pltpu.CompilerParams(
            dimension_semantics=("parallel",)),
    )(xsf, w_taps, mask, gamma2, beta2, alpha1)

    # Crop the halo/tail and restore NCHW.
    out = out_pad[:, :, :Fh].reshape(N, C_out, Hh, Wh)[:, :, :Ho, :Wo]
    return out


block_forward = jax.jit(block_forward)


def _reference(x, conv_w, gamma, beta, alpha):
    """Pure-JAX (XLA) reference of the same forward pass, f32."""
    xp = jnp.pad(x, ((0, 0), (0, 0), (1, 1), (1, 1)), mode="reflect")
    y = jax.lax.conv_general_dilated(
        xp, conv_w, window_strides=(2, 2), padding="VALID",
        dimension_numbers=("NCHW", "OIHW", "NCHW"))
    mean = y.mean(axis=(2, 3), keepdims=True)
    var = y.var(axis=(2, 3), keepdims=True)
    yn = (y - mean) * jax.lax.rsqrt(var + EPS)
    yn = yn * gamma.reshape(1, -1, 1, 1) + beta.reshape(1, -1, 1, 1)
    return jnp.where(yn >= 0.0, yn, alpha * yn)


if __name__ == "__main__":
    # Small deterministic setup consistent with the module's forward.
    N, C_in, H, W = 2, 4, 16, 16
    C_out = 8

    key = jax.random.PRNGKey(0)
    kx, kw, kg, kb = jax.random.split(key, 4)

    x = jax.random.normal(kx, (N, C_in, H, W), dtype=jnp.float32)
    conv_w = jax.random.normal(kw, (C_out, C_in, 4, 4), dtype=jnp.float32) * 0.1
    gamma = 1.0 + 0.1 * jax.random.normal(kg, (C_out,), dtype=jnp.float32)
    beta = 0.1 * jax.random.normal(kb, (C_out,), dtype=jnp.float32)
    alpha = 0.25  # nn.PReLU() default init

    out = block_forward(x, conv_w, gamma, beta, alpha)
    out = jax.block_until_ready(out)

    assert out.shape == (N, C_out, H // 2, W // 2), out.shape
    assert bool(jnp.all(jnp.isfinite(out)))

    # Correctness vs. pure-JAX reference (bf16 matmul inputs => loose tol).
    ref = jax.block_until_ready(_reference(x, conv_w, gamma, beta, alpha))
    assert bool(jnp.allclose(out, ref, atol=5e-2, rtol=5e-2)), float(
        jnp.max(jnp.abs(out - ref)))

    print("KERNEL_OK")
</pallas_src>

<mosaic_0001>
module attributes {stable_mosaic.version = 11 : i64} {
  func.func @kernel(%arg0: i32, %arg1: memref<1x4x4x256xbf16, #tpu.memory_space<vmem>>, %arg2: memref<16x8x4xbf16, #tpu.memory_space<vmem>>, %arg3: memref<1x128xf32, #tpu.memory_space<vmem>>, %arg4: memref<8x1xf32, #tpu.memory_space<vmem>>, %arg5: memref<8x1xf32, #tpu.memory_space<vmem>>, %arg6: memref<1xf32, #tpu.memory_space<smem>>, %arg7: memref<1x8x128xf32, #tpu.memory_space<vmem>>) attributes {dimension_semantics = [#tpu.dimension_semantics<parallel>], iteration_bounds = array<i64: 2>, scalar_prefetch = 0 : i64, scratch_operands = 0 : i64, tpu.core_type = #tpu.core_type<tc>, window_params = [{transform_indices = @transform_0, window_bounds = array<i64: 1, 4, 4, 256>}, {pipeline_mode = #tpu.pipeline_mode<synchronous>, transform_indices = @transform_1, window_bounds = array<i64: 16, 8, 4>}, {pipeline_mode = #tpu.pipeline_mode<synchronous>, transform_indices = @transform_2, window_bounds = array<i64: 1, 128>}, {pipeline_mode = #tpu.pipeline_mode<synchronous>, transform_indices = @transform_3, window_bounds = array<i64: 8, 1>}, {pipeline_mode = #tpu.pipeline_mode<synchronous>, transform_indices = @transform_4, window_bounds = array<i64: 8, 1>}, {transform_indices = @transform_5, window_bounds = array<i64: 1>}, {transform_indices = @transform_6, window_bounds = array<i64: 1, 8, 128>}]} {
    %c0 = arith.constant 0 : index
    %c0_0 = arith.constant 0 : index
    %c0_1 = arith.constant 0 : index
    %c0_2 = arith.constant 0 : index
    %0 = vector.load %arg1[%c0, %c0_0, %c0_1, %c0_2] : memref<1x4x4x256xbf16, #tpu.memory_space<vmem>>, vector<1x1x4x256xbf16>
    %1 = vector.shape_cast %0 : vector<1x1x4x256xbf16> to vector<4x256xbf16>
    %2 = vector.extract_strided_slice %1 {offsets = [0, 0], sizes = [4, 128], strides = [1, 1]} : vector<4x256xbf16> to vector<4x128xbf16>
    %c0_3 = arith.constant 0 : index
    %c0_4 = arith.constant 0 : index
    %c0_5 = arith.constant 0 : index
    %3 = vector.load %arg2[%c0_3, %c0_4, %c0_5] : memref<16x8x4xbf16, #tpu.memory_space<vmem>>, vector<1x8x4xbf16>
    %4 = vector.shape_cast %3 : vector<1x8x4xbf16> to vector<8x4xbf16>
    %cst = arith.constant dense<0.000000e+00> : vector<8x128xf32>
    %5 = tpu.matmul %4, %2, %cst {dimension_numbers = #tpu.dot_dimension_numbers<[1], [0], [0], [1], [0, 0, 1, 1], [], []>} : vector<8x4xbf16>, vector<4x128xbf16>, vector<8x128xf32> -> vector<8x128xf32>
    %6 = vector.extract_strided_slice %1 {offsets = [0, 1], sizes = [4, 128], strides = [1, 1]} : vector<4x256xbf16> to vector<4x128xbf16>
    %c1 = arith.constant 1 : index
    %c0_6 = arith.constant 0 : index
    %c0_7 = arith.constant 0 : index
    %7 = vector.load %arg2[%c1, %c0_6, %c0_7] : memref<16x8x4xbf16, #tpu.memory_space<vmem>>, vector<1x8x4xbf16>
    %8 = vector.shape_cast %7 : vector<1x8x4xbf16> to vector<8x4xbf16>
    %cst_8 = arith.constant dense<0.000000e+00> : vector<8x128xf32>
    %9 = tpu.matmul %8, %6, %cst_8 {dimension_numbers = #tpu.dot_dimension_numbers<[1], [0], [0], [1], [0, 0, 1, 1], [], []>} : vector<8x4xbf16>, vector<4x128xbf16>, vector<8x128xf32> -> vector<8x128xf32>
    %10 = arith.addf %5, %9 : vector<8x128xf32>
    %11 = vector.extract_strided_slice %1 {offsets = [0, 9], sizes = [4, 128], strides = [1, 1]} : vector<4x256xbf16> to vector<4x128xbf16>
    %c2 = arith.constant 2 : index
    %c0_9 = arith.constant 0 : index
    %c0_10 = arith.constant 0 : index
    %12 = vector.load %arg2[%c2, %c0_9, %c0_10] : memref<16x8x4xbf16, #tpu.memory_space<vmem>>, vector<1x8x4xbf16>
    %13 = vector.shape_cast %12 : vector<1x8x4xbf16> to vector<8x4xbf16>
    %cst_11 = arith.constant dense<0.000000e+00> : vector<8x128xf32>
    %14 = tpu.matmul %13, %11, %cst_11 {dimension_numbers = #tpu.dot_dimension_numbers<[1], [0], [0], [1], [0, 0, 1, 1], [], []>} : vector<8x4xbf16>, vector<4x128xbf16>, vector<8x128xf32> -> vector<8x128xf32>
    %15 = arith.addf %10, %14 : vector<8x128xf32>
    %16 = vector.extract_strided_slice %1 {offsets = [0, 10], sizes = [4, 128], strides = [1, 1]} : vector<4x256xbf16> to vector<4x128xbf16>
    %c3 = arith.constant 3 : index
    %c0_12 = arith.constant 0 : index
    %c0_13 = arith.constant 0 : index
    %17 = vector.load %arg2[%c3, %c0_12, %c0_13] : memref<16x8x4xbf16, #tpu.memory_space<vmem>>, vector<1x8x4xbf16>
    %18 = vector.shape_cast %17 : vector<1x8x4xbf16> to vector<8x4xbf16>
    %cst_14 = arith.constant dense<0.000000e+00> : vector<8x128xf32>
    %19 = tpu.matmul %18, %16, %cst_14 {dimension_numbers = #tpu.dot_dimension_numbers<[1], [0], [0], [1], [0, 0, 1, 1], [], []>} : vector<8x4xbf16>, vector<4x128xbf16>, vector<8x128xf32> -> vector<8x128xf32>
    %20 = arith.addf %15, %19 : vector<8x128xf32>
    %c0_15 = arith.constant 0 : index
    %c1_16 = arith.constant 1 : index
    %c0_17 = arith.constant 0 : index
    %c0_18 = arith.constant 0 : index
    %21 = vector.load %arg1[%c0_15, %c1_16, %c0_17, %c0_18] : memref<1x4x4x256xbf16, #tpu.memory_space<vmem>>, vector<1x1x4x256xbf16>
    %22 = vector.shape_cast %21 : vector<1x1x4x256xbf16> to vector<4x256xbf16>
    %23 = vector.extract_strided_slice %22 {offsets = [0, 0], sizes = [4, 128], strides = [1, 1]} : vector<4x256xbf16> to vector<4x128xbf16>
    %c4 = arith.constant 4 : index
    %c0_19 = arith.constant 0 : index
    %c0_20 = arith.constant 0 : index
    %24 = vector.load %arg2[%c4, %c0_19, %c0_20] : memref<16x8x4xbf16, #tpu.memory_space<vmem>>, vector<1x8x4xbf16>
    %25 = vector.shape_cast %24 : vector<1x8x4xbf16> to vector<8x4xbf16>
    %cst_21 = arith.constant dense<0.000000e+00> : vector<8x128xf32>
    %26 = tpu.matmul %25, %23, %cst_21 {dimension_numbers = #tpu.dot_dimension_numbers<[1], [0], [0], [1], [0, 0, 1, 1], [], []>} : vector<8x4xbf16>, vector<4x128xbf16>, vector<8x128xf32> -> vector<8x128xf32>
    %27 = arith.addf %20, %26 : vector<8x128xf32>
    %28 = vector.extract_strided_slice %22 {offsets = [0, 1], sizes = [4, 128], strides = [1, 1]} : vector<4x256xbf16> to vector<4x128xbf16>
    %c5 = arith.constant 5 : index
    %c0_22 = arith.constant 0 : index
    %c0_23 = arith.constant 0 : index
    %29 = vector.load %arg2[%c5, %c0_22, %c0_23] : memref<16x8x4xbf16, #tpu.memory_space<vmem>>, vector<1x8x4xbf16>
    %30 = vector.shape_cast %29 : vector<1x8x4xbf16> to vector<8x4xbf16>
    %cst_24 = arith.constant dense<0.000000e+00> : vector<8x128xf32>
    %31 = tpu.matmul %30, %28, %cst_24 {dimension_numbers = #tpu.dot_dimension_numbers<[1], [0], [0], [1], [0, 0, 1, 1], [], []>} : vector<8x4xbf16>, vector<4x128xbf16>, vector<8x128xf32> -> vector<8x128xf32>
    %32 = arith.addf %27, %31 : vector<8x128xf32>
    %33 = vector.extract_strided_slice %22 {offsets = [0, 9], sizes = [4, 128], strides = [1, 1]} : vector<4x256xbf16> to vector<4x128xbf16>
    %c6 = arith.constant 6 : index
    %c0_25 = arith.constant 0 : index
    %c0_26 = arith.constant 0 : index
    %34 = vector.load %arg2[%c6, %c0_25, %c0_26] : memref<16x8x4xbf16, #tpu.memory_space<vmem>>, vector<1x8x4xbf16>
    %35 = vector.shape_cast %34 : vector<1x8x4xbf16> to vector<8x4xbf16>
    %cst_27 = arith.constant dense<0.000000e+00> : vector<8x128xf32>
    %36 = tpu.matmul %35, %33, %cst_27 {dimension_numbers = #tpu.dot_dimension_numbers<[1], [0], [0], [1], [0, 0, 1, 1], [], []>} : vector<8x4xbf16>, vector<4x128xbf16>, vector<8x128xf32> -> vector<8x128xf32>
    %37 = arith.addf %32, %36 : vector<8x128xf32>
    %38 = vector.extract_strided_slice %22 {offsets = [0, 10], sizes = [4, 128], strides = [1, 1]} : vector<4x256xbf16> to vector<4x128xbf16>
    %c7 = arith.constant 7 : index
    %c0_28 = arith.constant 0 : index
    %c0_29 = arith.constant 0 : index
    %39 = vector.load %arg2[%c7, %c0_28, %c0_29] : memref<16x8x4xbf16, #tpu.memory_space<vmem>>, vector<1x8x4xbf16>
    %40 = vector.shape_cast %39 : vector<1x8x4xbf16> to vector<8x4xbf16>
    %cst_30 = arith.constant dense<0.000000e+00> : vector<8x128xf32>
    %41 = tpu.matmul %40, %38, %cst_30 {dimension_numbers = #tpu.dot_dimension_numbers<[1], [0], [0], [1], [0, 0, 1, 1], [], []>} : vector<8x4xbf16>, vector<4x128xbf16>, vector<8x128xf32> -> vector<8x128xf32>
    %42 = arith.addf %37, %41 : vector<8x128xf32>
    %c0_31 = arith.constant 0 : index
    %c2_32 = arith.constant 2 : index
    %c0_33 = arith.constant 0 : index
    %c0_34 = arith.constant 0 : index
    %43 = vector.load %arg1[%c0_31, %c2_32, %c0_33, %c0_34] : memref<1x4x4x256xbf16, #tpu.memory_space<vmem>>, vector<1x1x4x256xbf16>
    %44 = vector.shape_cast %43 : vector<1x1x4x256xbf16> to vector<4x256xbf16>
    %45 = vector.extract_strided_slice %44 {offsets = [0, 0], sizes = [4, 128], strides = [1, 1]} : vector<4x256xbf16> to vector<4x128xbf16>
    %c8 = arith.constant 8 : index
    %c0_35 = arith.constant 0 : index
    %c0_36 = arith.constant 0 : index
    %46 = vector.load %arg2[%c8, %c0_35, %c0_36] : memref<16x8x4xbf16, #tpu.memory_space<vmem>>, vector<1x8x4xbf16>
    %47 = vector.shape_cast %46 : vector<1x8x4xbf16> to vector<8x4xbf16>
    %cst_37 = arith.constant dense<0.000000e+00> : vector<8x128xf32>
    %48 = tpu.matmul %47, %45, %cst_37 {dimension_numbers = #tpu.dot_dimension_numbers<[1], [0], [0], [1], [0, 0, 1, 1], [], []>} : vector<8x4xbf16>, vector<4x128xbf16>, vector<8x128xf32> -> vector<8x128xf32>
    %49 = arith.addf %42, %48 : vector<8x128xf32>
    %50 = vector.extract_strided_slice %44 {offsets = [0, 1], sizes = [4, 128], strides = [1, 1]} : vector<4x256xbf16> to vector<4x128xbf16>
    %c9 = arith.constant 9 : index
    %c0_38 = arith.constant 0 : index
    %c0_39 = arith.constant 0 : index
    %51 = vector.load %arg2[%c9, %c0_38, %c0_39] : memref<16x8x4xbf16, #tpu.memory_space<vmem>>, vector<1x8x4xbf16>
    %52 = vector.shape_cast %51 : vector<1x8x4xbf16> to vector<8x4xbf16>
    %cst_40 = arith.constant dense<0.000000e+00> : vector<8x128xf32>
    %53 = tpu.matmul %52, %50, %cst_40 {dimension_numbers = #tpu.dot_dimension_numbers<[1], [0], [0], [1], [0, 0, 1, 1], [], []>} : vector<8x4xbf16>, vector<4x128xbf16>, vector<8x128xf32> -> vector<8x128xf32>
    %54 = arith.addf %49, %53 : vector<8x128xf32>
    %55 = vector.extract_strided_slice %44 {offsets = [0, 9], sizes = [4, 128], strides = [1, 1]} : vector<4x256xbf16> to vector<4x128xbf16>
    %c10 = arith.constant 10 : index
    %c0_41 = arith.constant 0 : index
    %c0_42 = arith.constant 0 : index
    %56 = vector.load %arg2[%c10, %c0_41, %c0_42] : memref<16x8x4xbf16, #tpu.memory_space<vmem>>, vector<1x8x4xbf16>
    %57 = vector.shape_cast %56 : vector<1x8x4xbf16> to vector<8x4xbf16>
    %cst_43 = arith.constant dense<0.000000e+00> : vector<8x128xf32>
    %58 = tpu.matmul %57, %55, %cst_43 {dimension_numbers = #tpu.dot_dimension_numbers<[1], [0], [0], [1], [0, 0, 1, 1], [], []>} : vector<8x4xbf16>, vector<4x128xbf16>, vector<8x128xf32> -> vector<8x128xf32>
    %59 = arith.addf %54, %58 : vector<8x128xf32>
    %60 = vector.extract_strided_slice %44 {offsets = [0, 10], sizes = [4, 128], strides = [1, 1]} : vector<4x256xbf16> to vector<4x128xbf16>
    %c11 = arith.constant 11 : index
    %c0_44 = arith.constant 0 : index
    %c0_45 = arith.constant 0 : index
    %61 = vector.load %arg2[%c11, %c0_44, %c0_45] : memref<16x8x4xbf16, #tpu.memory_space<vmem>>, vector<1x8x4xbf16>
    %62 = vector.shape_cast %61 : vector<1x8x4xbf16> to vector<8x4xbf16>
    %cst_46 = arith.constant dense<0.000000e+00> : vector<8x128xf32>
    %63 = tpu.matmul %62, %60, %cst_46 {dimension_numbers = #tpu.dot_dimension_numbers<[1], [0], [0], [1], [0, 0, 1, 1], [], []>} : vector<8x4xbf16>, vector<4x128xbf16>, vector<8x128xf32> -> vector<8x128xf32>
    %64 = arith.addf %59, %63 : vector<8x128xf32>
    %c0_47 = arith.constant 0 : index
    %c3_48 = arith.constant 3 : index
    %c0_49 = arith.constant 0 : index
    %c0_50 = arith.constant 0 : index
    %65 = vector.load %arg1[%c0_47, %c3_48, %c0_49, %c0_50] : memref<1x4x4x256xbf16, #tpu.memory_space<vmem>>, vector<1x1x4x256xbf16>
    %66 = vector.shape_cast %65 : vector<1x1x4x256xbf16> to vector<4x256xbf16>
    %67 = vector.extract_strided_slice %66 {offsets = [0, 0], sizes = [4, 128], strides = [1, 1]} : vector<4x256xbf16> to vector<4x128xbf16>
    %c12 = arith.constant 12 : index
    %c0_51 = arith.constant 0 : index
    %c0_52 = arith.constant 0 : index
    %68 = vector.load %arg2[%c12, %c0_51, %c0_52] : memref<16x8x4xbf16, #tpu.memory_space<vmem>>, vector<1x8x4xbf16>
    %69 = vector.shape_cast %68 : vector<1x8x4xbf16> to vector<8x4xbf16>
    %cst_53 = arith.constant dense<0.000000e+00> : vector<8x128xf32>
    %70 = tpu.matmul %69, %67, %cst_53 {dimension_numbers = #tpu.dot_dimension_numbers<[1], [0], [0], [1], [0, 0, 1, 1], [], []>} : vector<8x4xbf16>, vector<4x128xbf16>, vector<8x128xf32> -> vector<8x128xf32>
    %71 = arith.addf %64, %70 : vector<8x128xf32>
    %72 = vector.extract_strided_slice %66 {offsets = [0, 1], sizes = [4, 128], strides = [1, 1]} : vector<4x256xbf16> to vector<4x128xbf16>
    %c13 = arith.constant 13 : index
    %c0_54 = arith.constant 0 : index
    %c0_55 = arith.constant 0 : index
    %73 = vector.load %arg2[%c13, %c0_54, %c0_55] : memref<16x8x4xbf16, #tpu.memory_space<vmem>>, vector<1x8x4xbf16>
    %74 = vector.shape_cast %73 : vector<1x8x4xbf16> to vector<8x4xbf16>
    %cst_56 = arith.constant dense<0.000000e+00> : vector<8x128xf32>
    %75 = tpu.matmul %74, %72, %cst_56 {dimension_numbers = #tpu.dot_dimension_numbers<[1], [0], [0], [1], [0, 0, 1, 1], [], []>} : vector<8x4xbf16>, vector<4x128xbf16>, vector<8x128xf32> -> vector<8x128xf32>
    %76 = arith.addf %71, %75 : vector<8x128xf32>
    %77 = vector.extract_strided_slice %66 {offsets = [0, 9], sizes = [4, 128], strides = [1, 1]} : vector<4x256xbf16> to vector<4x128xbf16>
    %c14 = arith.constant 14 : index
    %c0_57 = arith.constant 0 : index
    %c0_58 = arith.constant 0 : index
    %78 = vector.load %arg2[%c14, %c0_57, %c0_58] : memref<16x8x4xbf16, #tpu.memory_space<vmem>>, vector<1x8x4xbf16>
    %79 = vector.shape_cast %78 : vector<1x8x4xbf16> to vector<8x4xbf16>
    %cst_59 = arith.constant dense<0.000000e+00> : vector<8x128xf32>
    %80 = tpu.matmul %79, %77, %cst_59 {dimension_numbers = #tpu.dot_dimension_numbers<[1], [0], [0], [1], [0, 0, 1, 1], [], []>} : vector<8x4xbf16>, vector<4x128xbf16>, vector<8x128xf32> -> vector<8x128xf32>
    %81 = arith.addf %76, %80 : vector<8x128xf32>
    %82 = vector.extract_strided_slice %66 {offsets = [0, 10], sizes = [4, 128], strides = [1, 1]} : vector<4x256xbf16> to vector<4x128xbf16>
    %c15 = arith.constant 15 : index
    %c0_60 = arith.constant 0 : index
    %c0_61 = arith.constant 0 : index
    %83 = vector.load %arg2[%c15, %c0_60, %c0_61] : memref<16x8x4xbf16, #tpu.memory_space<vmem>>, vector<1x8x4xbf16>
    %84 = vector.shape_cast %83 : vector<1x8x4xbf16> to vector<8x4xbf16>
    %cst_62 = arith.constant dense<0.000000e+00> : vector<8x128xf32>
    %85 = tpu.matmul %84, %82, %cst_62 {dimension_numbers = #tpu.dot_dimension_numbers<[1], [0], [0], [1], [0, 0, 1, 1], [], []>} : vector<8x4xbf16>, vector<4x128xbf16>, vector<8x128xf32> -> vector<8x128xf32>
    %86 = arith.addf %81, %85 : vector<8x128xf32>
    %c0_63 = arith.constant 0 : index
    %c0_64 = arith.constant 0 : index
    %87 = vector.load %arg3[%c0_63, %c0_64] : memref<1x128xf32, #tpu.memory_space<vmem>>, vector<1x128xf32>
    %88 = vector.broadcast %87 : vector<1x128xf32> to vector<8x128xf32>
    %89 = arith.mulf %86, %88 : vector<8x128xf32>
    %cst_65 = arith.constant dense<0.000000e+00> : vector<8xf32>
    %90 = vector.multi_reduction <add>, %89, %cst_65 [1] : vector<8x128xf32> to vector<8xf32>
    %91 = vector.shape_cast %90 : vector<8xf32> to vector<8x1xf32>
    %cst_66 = arith.constant 1.562500e-02 : f32
    %92 = vector.broadcast %cst_66 : f32 to vector<8x1xf32>
    %93 = arith.mulf %91, %92 : vector<8x1xf32>
    %94 = vector.broadcast %93 : vector<8x1xf32> to vector<8x128xf32>
    %95 = arith.subf %86, %94 : vector<8x128xf32>
    %96 = vector.broadcast %87 : vector<1x128xf32> to vector<8x128xf32>
    %97 = arith.mulf %95, %96 : vector<8x128xf32>
    %98 = arith.mulf %97, %97 : vector<8x128xf32>
    %cst_67 = arith.constant dense<0.000000e+00> : vector<8xf32>
    %99 = vector.multi_reduction <add>, %98, %cst_67 [1] : vector<8x128xf32> to vector<8xf32>
    %100 = vector.shape_cast %99 : vector<8xf32> to vector<8x1xf32>
    %cst_68 = arith.constant 1.562500e-02 : f32
    %101 = vector.broadcast %cst_68 : f32 to vector<8x1xf32>
    %102 = arith.mulf %100, %101 : vector<8x1xf32>
    %c0_69 = arith.constant 0 : index
    %c0_70 = arith.constant 0 : index
    %103 = vector.load %arg4[%c0_69, %c0_70] : memref<8x1xf32, #tpu.memory_space<vmem>>, vector<8x1xf32>
    %cst_71 = arith.constant 9.99999974E-6 : f32
    %104 = vector.broadcast %cst_71 : f32 to vector<8x1xf32>
    %105 = arith.addf %102, %104 : vector<8x1xf32>
    %106 = math.rsqrt %105 : vector<8x1xf32>
    %107 = arith.mulf %103, %106 : vector<8x1xf32>
    %c0_72 = arith.constant 0 : index
    %c0_73 = arith.constant 0 : index
    %108 = vector.load %arg5[%c0_72, %c0_73] : memref<8x1xf32, #tpu.memory_space<vmem>>, vector<8x1xf32>
    %109 = arith.mulf %93, %107 : vector<8x1xf32>
    %110 = arith.subf %108, %109 : vector<8x1xf32>
    %111 = vector.broadcast %107 : vector<8x1xf32> to vector<8x128xf32>
    %112 = arith.mulf %86, %111 : vector<8x128xf32>
    %113 = vector.broadcast %110 : vector<8x1xf32> to vector<8x128xf32>
    %114 = arith.addf %112, %113 : vector<8x128xf32>
    %c0_74 = arith.constant 0 : index
    %115 = memref.load %arg6[%c0_74] : memref<1xf32, #tpu.memory_space<smem>>
    %cst_75 = arith.constant 0.000000e+00 : f32
    %116 = vector.broadcast %cst_75 : f32 to vector<8x128xf32>
    %117 = arith.cmpf oge, %114, %116 : vector<8x128xf32>
    %118 = vector.broadcast %115 : f32 to vector<8x128xf32>
    %119 = arith.mulf %118, %114 : vector<8x128xf32>
    %120 = arith.select %117, %114, %119 : vector<8x128xi1>, vector<8x128xf32>
    %c0_76 = arith.constant 0 : index
    %c0_77 = arith.constant 0 : index
    %c0_78 = arith.constant 0 : index
    %121 = vector.load %arg7[%c0_76, %c0_77, %c0_78] : memref<1x8x128xf32, #tpu.memory_space<vmem>>, vector<1x8x128xf32>
    %122 = vector.shape_cast %121 : vector<1x8x128xf32> to vector<8x128xf32>
    %123 = vector.shape_cast %120 : vector<8x128xf32> to vector<1x8x128xf32>
    tpu.vector_store %arg7[%c0_76, %c0_77, %c0_78], %123 {strides = array<i32>} : memref<1x8x128xf32, #tpu.memory_space<vmem>>, vector<1x8x128xf32>,
    return
  }
  func.func @transform_0(%arg0: i32) -> (i32, i32, i32, i32) {
    %c0_i32 = arith.constant 0 : i32
    %c0_i32_0 = arith.constant 0 : i32
    %c0_i32_1 = arith.constant 0 : i32
    %c0_i32_2 = arith.constant 0 : i32
    return %arg0, %c0_i32, %c0_i32_0, %c0_i32_1 : i32, i32, i32, i32
  }
  func.func @transform_1(%arg0: i32) -> (i32, i32, i32) {
    %c0_i32 = arith.constant 0 : i32
    %c0_i32_0 = arith.constant 0 : i32
    %c0_i32_1 = arith.constant 0 : i32
    %c0_i32_2 = arith.constant 0 : i32
    return %c0_i32, %c0_i32_0, %c0_i32_1 : i32, i32, i32
  }
  func.func @transform_2(%arg0: i32) -> (i32, i32) {
    %c0_i32 = arith.constant 0 : i32
    %c0_i32_0 = arith.constant 0 : i32
    %c0_i32_1 = arith.constant 0 : i32
    return %c0_i32, %c0_i32_0 : i32, i32
  }
  func.func @transform_3(%arg0: i32) -> (i32, i32) {
    %c0_i32 = arith.constant 0 : i32
    %c0_i32_0 = arith.constant 0 : i32
    %c0_i32_1 = arith.constant 0 : i32
    return %c0_i32, %c0_i32_0 : i32, i32
  }
  func.func @transform_4(%arg0: i32) -> (i32, i32) {
    %c0_i32 = arith.constant 0 : i32
    %c0_i32_0 = arith.constant 0 : i32
    %c0_i32_1 = arith.constant 0 : i32
    return %c0_i32, %c0_i32_0 : i32, i32
  }
  func.func @transform_5(%arg0: i32) -> i32 {
    %c0_i32 = arith.constant 0 : i32
    %c0_i32_0 = arith.constant 0 : i32
    return %c0_i32 : i32
  }
  func.func @transform_6(%arg0: i32) -> (i32, i32, i32) {
    %c0_i32 = arith.constant 0 : i32
    %c0_i32_0 = arith.constant 0 : i32
    %c0_i32_1 = arith.constant 0 : i32
    return %arg0, %c0_i32, %c0_i32_0 : i32, i32, i32
  }
}

</mosaic_0001>

<llo_original>
// kernel: block_forward.1
$region0: #{block_forward.1}
  #allocation0 [shape = 'u32[]', space=smem, size = 0x4, offset = 0x4, fixed_abs, tag = 'smem constant byte address 0x4 - core index']
  #allocation1 [shape = 'u32[144,128]{1,0:T(1,128)}', space=vmem, size = 0x12000, scoped, tag = 'internal scratch']
  #allocation2 [shape = 'f32[1]{0:T(128)S(6)}', space=smem, size = 0x200, scoped, tag = 'scoped memory for block_forward.1']
  %s0 = inlined_call_operand.vmem [shape: bf16[2,4,4,256], index: 0, kind: input, shape index: {}]
  %s1 = inlined_call_operand.vmem [shape: bf16[16,8,4], index: 1, kind: input, shape index: {}]
  %s2 = inlined_call_operand.vmem [shape: f32[1,128], index: 2, kind: input, shape index: {}]
  %s3 = inlined_call_operand.vmem [shape: f32[8,1], index: 3, kind: input, shape index: {}]
  %s4 = inlined_call_operand.vmem [shape: f32[8,1], index: 4, kind: input, shape index: {}]
  %s5 = inlined_call_operand.<no memory space> [shape: f32[1], index: 5, kind: input, shape index: {}]
  %s6 = inlined_call_operand.vmem [shape: f32[2,8,128], index: 6, kind: output, shape index: {}]
  %s7 = sld [smem:[#allocation0]]
  $region57: #{block_forward.1} parent=0
    _
  %s9 = ssub.s32 1, %s7
  %s10 = scalar_select 0, %s9, %s7
  %11 = sst [smem:[#allocation2]] %s5
  loop: start=0, step=1, limit=4
  $region2: #{block_forward.1} parent=0 // loop_pre_header
    _
  $region3: #{block_forward.1} parent=0 // loop_header
    %s13 = sphi 0, %s17
    %p14 = scmp.ge.s32.totalorder %s13, 4
    %s23 = sphi 0, %s25
    %s26 = sphi 0, %s23
    %s27 = sphi 0, %s26
    %s43 = sphi 0, %s27
    %s47 = sphi 0, %s47
    %s49 = sphi 0, %s47
    %s50 = sphi 0, %s49
    %s64 = sphi 0, %s50
    %s68 = sphi 0, %s68
    %s70 = sphi 0, %s68
    %s71 = sphi 0, %s70
    %s85 = sphi 0, %s71
    %s89 = sphi 0, %s89
    %s91 = sphi 0, %s89
    %s92 = sphi 0, %s91
    %s106 = sphi 0, %s92
    %s110 = sphi 0, %s110
    %s112 = sphi 0, %s110
    %s113 = sphi 0, %s112
    %s127 = sphi 0, %s113
    %s131 = sphi 0, %s131
    %s133 = sphi 0, %s131
    %s134 = sphi 0, %s133
    %s148 = sphi 0, %s134
    %s154 = sphi 0, %s156
    %s157 = sphi 0, %s154
    %s158 = sphi 0, %s157
    %s174 = sphi 0, %s158
  $region4: #{block_forward.1} parent=0 // loop_header_branch
    %16 = sbr.rel (%p14) target = $region8
  $region5: #{block_forward.1} parent=0 // loop_body
    %s18 = ssub.s32 %s13, 1
    %s19 = ssub.s32 %s13, 2
    %s20 = sadd.s32 %s13, 1
    %s21 = ssub.s32 %s13, %s20
    %p22 = scmp.eq.s32.totalorder %s21, 0
    %s24 = sadd.s32 %s23, 1
    %s25 = scalar_select %p22, %s23, %s24
    %p28 = pneg %p22
    %p29 = scmp.eq.s32.totalorder %s13, 1
    %p30 = por %p28, %p29
    %p31 = scmp.ne.s32.totalorder %s23, %s26
    %p32 = scmp.eq.s32.totalorder %s13, 0
    %p33 = por %p31, %p32
    %p34 = scmp.ne.s32.totalorder %s23, %s26
    %p35 = scmp.eq.s32.totalorder %s18, 1
    %p36 = por %p34, %p35
    %p37 = scmp.ne.s32.totalorder %s26, %s27
    %p38 = scmp.eq.s32.totalorder %s18, 0
    %p39 = por %p37, %p38
    %p40 = scmp.ne.s32.totalorder %s26, %s27
    %p41 = scmp.eq.s32.totalorder %s19, 1
    %p42 = por %p40, %p41
    %p44 = scmp.ne.s32.totalorder %s27, %s43
    %p45 = scmp.eq.s32.totalorder %s19, 0
    %p46 = por %p44, %p45
    %s48 = sadd.s32 %s47, 1
    %p51 = scmp.eq.s32.totalorder %s13, 1
    %p52 = scmp.ne.s32.totalorder %s47, %s49
    %p53 = scmp.eq.s32.totalorder %s13, 0
    %p54 = por %p52, %p53
    %p55 = scmp.ne.s32.totalorder %s47, %s49
    %p56 = scmp.eq.s32.totalorder %s18, 1
    %p57 = por %p55, %p56
    %p58 = scmp.ne.s32.totalorder %s49, %s50
    %p59 = scmp.eq.s32.totalorder %s18, 0
    %p60 = por %p58, %p59
    %p61 = scmp.ne.s32.totalorder %s49, %s50
    %p62 = scmp.eq.s32.totalorder %s19, 1
    %p63 = por %p61, %p62
    %p65 = scmp.ne.s32.totalorder %s50, %s64
    %p66 = scmp.eq.s32.totalorder %s19, 0
    %p67 = por %p65, %p66
    %s69 = sadd.s32 %s68, 1
    %p72 = scmp.eq.s32.totalorder %s13, 1
    %p73 = scmp.ne.s32.totalorder %s68, %s70
    %p74 = scmp.eq.s32.totalorder %s13, 0
    %p75 = por %p73, %p74
    %p76 = scmp.ne.s32.totalorder %s68, %s70
    %p77 = scmp.eq.s32.totalorder %s18, 1
    %p78 = por %p76, %p77
    %p79 = scmp.ne.s32.totalorder %s70, %s71
    %p80 = scmp.eq.s32.totalorder %s18, 0
    %p81 = por %p79, %p80
    %p82 = scmp.ne.s32.totalorder %s70, %s71
    %p83 = scmp.eq.s32.totalorder %s19, 1
    %p84 = por %p82, %p83
    %p86 = scmp.ne.s32.totalorder %s71, %s85
    %p87 = scmp.eq.s32.totalorder %s19, 0
    %p88 = por %p86, %p87
    %s90 = sadd.s32 %s89, 1
    %p93 = scmp.eq.s32.totalorder %s13, 1
    %p94 = scmp.ne.s32.totalorder %s89, %s91
    %p95 = scmp.eq.s32.totalorder %s13, 0
    %p96 = por %p94, %p95
    %p97 = scmp.ne.s32.totalorder %s89, %s91
    %p98 = scmp.eq.s32.totalorder %s18, 1
    %p99 = por %p97, %p98
    %p100 = scmp.ne.s32.totalorder %s91, %s92
    %p101 = scmp.eq.s32.totalorder %s18, 0
    %p102 = por %p100, %p101
    %p103 = scmp.ne.s32.totalorder %s91, %s92
    %p104 = scmp.eq.s32.totalorder %s19, 1
    %p105 = por %p103, %p104
    %p107 = scmp.ne.s32.totalorder %s92, %s106
    %p108 = scmp.eq.s32.totalorder %s19, 0
    %p109 = por %p107, %p108
    %s111 = sadd.s32 %s110, 1
    %p114 = scmp.eq.s32.totalorder %s13, 1
    %p115 = scmp.ne.s32.totalorder %s110, %s112
    %p116 = scmp.eq.s32.totalorder %s13, 0
    %p117 = por %p115, %p116
    %p118 = scmp.ne.s32.totalorder %s110, %s112
    %p119 = scmp.eq.s32.totalorder %s18, 1
    %p120 = por %p118, %p119
    %p121 = scmp.ne.s32.totalorder %s112, %s113
    %p122 = scmp.eq.s32.totalorder %s18, 0
    %p123 = por %p121, %p122
    %p124 = scmp.ne.s32.totalorder %s112, %s113
    %p125 = scmp.eq.s32.totalorder %s19, 1
    %p126 = por %p124, %p125
    %p128 = scmp.ne.s32.totalorder %s113, %s127
    %p129 = scmp.eq.s32.totalorder %s19, 0
    %p130 = por %p128, %p129
    %s132 = sadd.s32 %s131, 1
    %p135 = scmp.eq.s32.totalorder %s13, 1
    %p136 = scmp.ne.s32.totalorder %s131, %s133
    %p137 = scmp.eq.s32.totalorder %s13, 0
    %p138 = por %p136, %p137
    %p139 = scmp.ne.s32.totalorder %s131, %s133
    %p140 = scmp.eq.s32.totalorder %s18, 1
    %p141 = por %p139, %p140
    %p142 = scmp.ne.s32.totalorder %s133, %s134
    %p143 = scmp.eq.s32.totalorder %s18, 0
    %p144 = por %p142, %p143
    %p145 = scmp.ne.s32.totalorder %s133, %s134
    %p146 = scmp.eq.s32.totalorder %s19, 1
    %p147 = por %p145, %p146
    %p149 = scmp.ne.s32.totalorder %s134, %s148
    %p150 = scmp.eq.s32.totalorder %s19, 0
    %p151 = por %p149, %p150
    %s152 = ssub.s32 %s13, %s20
    %p153 = scmp.eq.s32.totalorder %s152, 0
    %s155 = sadd.s32 %s154, 1
    %s156 = scalar_select %p153, %s154, %s155
    %p159 = pneg %p153
    %p160 = scmp.eq.s32.totalorder %s13, 1
    %p161 = por %p159, %p160
    %p162 = scmp.ne.s32.totalorder %s154, %s157
    %p163 = scmp.eq.s32.totalorder %s13, 0
    %p164 = por %p162, %p163
    %p165 = scmp.ne.s32.totalorder %s154, %s157
    %p166 = scmp.eq.s32.totalorder %s18, 1
    %p167 = por %p165, %p166
    %p168 = scmp.ne.s32.totalorder %s157, %s158
    %p169 = scmp.eq.s32.totalorder %s18, 0
    %p170 = por %p168, %p169
    %p171 = scmp.ne.s32.totalorder %s157, %s158
    %p172 = scmp.eq.s32.totalorder %s19, 1
    %p173 = por %p171, %p172
    %p175 = scmp.ne.s32.totalorder %s158, %s174
    %p176 = scmp.eq.s32.totalorder %s19, 0
    %p177 = por %p175, %p176
    %p178 = scmp.le.s32.totalorder 1, %s13
    %p179 = scmp.lt.s32.totalorder %s13, 3
    %p180 = pnand %p178, %p179
    %p181 = pneg %p180
    // Predicated region
    $region9: #{block_forward.1} parent=5 // pred_check
      _
    $region10: #{block_forward.1} parent=5 // pred_check_branch
      %183 = sbr.rel (%p180) target = $region12
    $region11: #{block_forward.1} parent=5 // pred_region
      %s184 = ssub.s32 %s13, 1
      // Predicated region
      $region13: #{block_forward.1} parent=11 // pred_check
        %p185 = pneg %p60
      $region14: #{block_forward.1} parent=11 // pred_check_branch
        %187 = sbr.rel (%p185) target = $region16
      $region15: #{block_forward.1} parent=11 // pred_region
        _
      $region16: #{block_forward.1} parent=11 // pred_fallthru
        _
      // Predicated region
      $region17: #{block_forward.1} parent=11 // pred_check
        %p188 = pneg %p81
      $region18: #{block_forward.1} parent=11 // pred_check_branch
        %190 = sbr.rel (%p188) target = $region20
      $region19: #{block_forward.1} parent=11 // pred_region
        _
      $region20: #{block_forward.1} parent=11 // pred_fallthru
        _
      // Predicated region
      $region21: #{block_forward.1} parent=11 // pred_check
        %p191 = pneg %p102
      $region22: #{block_forward.1} parent=11 // pred_check_branch
        %193 = sbr.rel (%p191) target = $region24
      $region23: #{block_forward.1} parent=11 // pred_region
        _
      $region24: #{block_forward.1} parent=11 // pred_fallthru
        _
      // Predicated region
      $region25: #{block_forward.1} parent=11 // pred_check
        %p194 = pneg %p123
      $region26: #{block_forward.1} parent=11 // pred_check_branch
        %196 = sbr.rel (%p194) target = $region28
      $region27: #{block_forward.1} parent=11 // pred_region
        _
      $region28: #{block_forward.1} parent=11 // pred_fallthru
        _
      // Predicated region
      $region29: #{block_forward.1} parent=11 // pred_check
        %p197 = pneg %p144
      $region30: #{block_forward.1} parent=11 // pred_check_branch
        %199 = sbr.rel (%p197) target = $region32
      $region31: #{block_forward.1} parent=11 // pred_region
        _
      $region32: #{block_forward.1} parent=11 // pred_fallthru
        _
    $region12: #{block_forward.1} parent=5 // pred_fallthru
      _
    %p200 = scmp.lt.s32.totalorder %s13, 2
    // Predicated region
    $region33: #{block_forward.1} parent=5 // pred_check
      %p201 = pneg %p200
    $region34: #{block_forward.1} parent=5 // pred_check_branch
      %203 = sbr.rel (%p201) target = $region36
    $region35: #{block_forward.1} parent=5 // pred_region
      // Predicated region
      $region37: #{block_forward.1} parent=35 // pred_check
        %p204 = pneg %p33
      $region38: #{block_forward.1} parent=35 // pred_check_branch
        %206 = sbr.rel (%p204) target = $region40
      $region39: #{block_forward.1} parent=35 // pred_region
        %p207 = scmp.lt.s32.totalorder %s13, 1
        %s208 = scalar_select %p207, %s13, 1
        %s209 = smul.addr %s208, 8
        %s210 = smul.addr %s209, 2
        %s211 = scalar_lea.vmem %s0, %s210
      $region40: #{block_forward.1} parent=35 // pred_fallthru
        _
    $region36: #{block_forward.1} parent=5 // pred_fallthru
      _
    %p212 = scmp.le.s32.totalorder 1, %s13
    %p213 = scmp.lt.s32.totalorder %s13, 3
    %p214 = pnand %p212, %p213
    %p215 = pneg %p214
    // Predicated region
    $region41: #{block_forward.1} parent=5 // pred_check
      _
    $region42: #{block_forward.1} parent=5 // pred_check_branch
      %217 = sbr.rel (%p214) target = $region44
    $region43: #{block_forward.1} parent=5 // pred_region
      %s218 = ssub.s32 %s13, 1
      %p219 = scmp.lt.s32.totalorder %s18, 1
      %s220 = scalar_select %p219, %s18, 1
      %s221 = smul.addr %s220, 8
      %s222 = smul.addr %s221, 2
      %s223 = scalar_lea.vmem %s0, %s222
      %p224 = pneg %p39
      %p225 = pneg %p36
      %p226 = pneg %p60
      %p227 = pneg %p57
      %p228 = pneg %p81
      %p229 = pneg %p78
      %p230 = pneg %p102
      %p231 = pneg %p99
      %p232 = pneg %p123
      %p233 = pneg %p120
      %p234 = pneg %p144
      %p235 = pneg %p141
      %p236 = pneg %p170
      %p237 = pneg %p167
      %p238 = scmp.lt.s32.totalorder %s18, 1
      %s239 = scalar_select %p238, %s18, 1
      %s240 = smul.addr %s239, 8
      %s241 = scalar_lea.vmem %s6, %s240
      %p242 = scmp.lt.s32.totalorder %s18, 1
      %s243 = scalar_select %p242, %s18, 1
      %s244 = smul.addr %s243, 8
      %s245 = smul.addr %s244, 2
      %s246 = scalar_lea.vmem %s0, %s245
      %p247 = scmp.lt.s32.totalorder %s18, 1
      %s248 = scalar_select %p247, %s18, 1
      %s249 = smul.addr %s248, 8
      %s250 = scalar_lea.vmem %s6, %s249
      %v252 = vld [vmem:[%s246] sm:$0xf]
      %v253 = vld [vmem:[%s1] sm:$0xf]
      %s254 = scalar_lea.vmem %s1, 4
      %v255 = vld [vmem:[%s254] sm:$0xf]
      %v258 = vunpack.c.l.s4 1983009808
      %v259 = vunpack.c.0.s8 %v258
      %v260 = vlaneseq
      %v261 = vshrl.u32 %v260, 7
      %v262 = vsub.s32 %v259, %v261
      %v263 = vrot.slane %v252, %v262
      %v264 = vcombine.high %v263, %v263
      %265 = vrot.lane.b32.xlu0 %v263, 127
      %v266 = vpop.permute.xlu0 %265
      %267 = vrot.lane.b32.xlu0 %v264, 127
      %v268 = vpop.permute.xlu0 %267
      %vm269 = vcmask 1039360
      %v270 = vsel %vm269, %v266, %v268
      %vm271 = vcmask 31744
      %v273 = vsel %vm271, %v255, 0
      %vm275 = vcmask 1041408
      %v277 = vsel %vm275, %v270, 0
      %279 = vmatprep.subr.bf16.mxu0 0
      %280 = vmatpush1.bf16.msra.mxu0 %v277
      %281 = vmatprep.subr.bf16.mxu0 0
      %282 = vmatpush1.bf16.msra.mxu0 0
      %283 = vmatprep.subr.bf16.mxu0 0
      %284 = vmatpush1.bf16.msra.mxu0 0
      %285 = vmatprep.subr.bf16.mxu0 0
      %286 = vmatpush1.bf16.msra.mxu0 0
      %287 = vmatprep.subr.bf16.mxu0 0
      %288 = vmatpush1.bf16.msra.mxu0 0
      %289 = vmatprep.subr.bf16.mxu0 0
      %290 = vmatpush1.bf16.msra.mxu0 0
      %291 = vmatprep.subr.bf16.mxu0 0
      %292 = vmatpush1.bf16.msra.mxu0 0
      %293 = vmatprep.subr.bf16.mxu0 0
      %294 = vmatpush1.bf16.msra.mxu0 0
      %295 = vmatprep.subr.bf16.mxu0 0
      %296 = vmatpush1.bf16.msra.mxu0 0
      %297 = vmatprep.subr.bf16.mxu0 0
      %298 = vmatpush1.bf16.msra.mxu0 0
      %299 = vmatprep.subr.bf16.mxu0 0
      %300 = vmatpush1.bf16.msra.mxu0 0
      %301 = vmatprep.subr.bf16.mxu0 0
      %302 = vmatpush1.bf16.msra.mxu0 0
      %303 = vmatprep.subr.bf16.mxu0 0
      %304 = vmatpush1.bf16.msra.mxu0 0
      %305 = vmatprep.subr.bf16.mxu0 0
      %306 = vmatpush1.bf16.msra.mxu0 0
      %307 = vmatprep.subr.bf16.mxu0 0
      %308 = vmatpush1.bf16.msra.mxu0 0
      %309 = vmatprep.subr.bf16.mxu0 0
      %310 = vmatpush1.bf16.msra.mxu0 0
      %311 = vmatprep.mubr.bf16.mxu0 0
      %312 = vmatmul.mubr.bf16.gmra.mrb[0].mxu0 %v273
      %v313 = vpop.f32.mrb[0].mxu0
      %v314 = vadd.f32 0.0, %v313
      %v315 = vpop.f32.mrb[0].mxu0
      %v316 = vpop.f32.mrb[0].mxu0
      %v317 = vpop.f32.mrb[0].mxu0
      %318 = vdwg.mxu0
      %v320 = vsel %vm271, %v253, 0
      %v323 = vsel %vm275, %v252, 0
      %325 = vmatprep.subr.bf16.mxu0 0
      %326 = vmatpush1.bf16.msra.mxu0 %v323
      %327 = vmatprep.subr.bf16.mxu0 0
      %328 = vmatpush1.bf16.msra.mxu0 0
      %329 = vmatprep.subr.bf16.mxu0 0
      %330 = vmatpush1.bf16.msra.mxu0 0
      %331 = vmatprep.subr.bf16.mxu0 0
      %332 = vmatpush1.bf16.msra.mxu0 0
      %333 = vmatprep.subr.bf16.mxu0 0
      %334 = vmatpush1.bf16.msra.mxu0 0
      %335 = vmatprep.subr.bf16.mxu0 0
      %336 = vmatpush1.bf16.msra.mxu0 0
      %337 = vmatprep.subr.bf16.mxu0 0
      %338 = vmatpush1.bf16.msra.mxu0 0
      %339 = vmatprep.subr.bf16.mxu0 0
      %340 = vmatpush1.bf16.msra.mxu0 0
      %341 = vmatprep.subr.bf16.mxu0 0
      %342 = vmatpush1.bf16.msra.mxu0 0
      %343 = vmatprep.subr.bf16.mxu0 0
      %344 = vmatpush1.bf16.msra.mxu0 0
      %345 = vmatprep.subr.bf16.mxu0 0
      %346 = vmatpush1.bf16.msra.mxu0 0
      %347 = vmatprep.subr.bf16.mxu0 0
      %348 = vmatpush1.bf16.msra.mxu0 0
      %349 = vmatprep.subr.bf16.mxu0 0
      %350 = vmatpush1.bf16.msra.mxu0 0
      %351 = vmatprep.subr.bf16.mxu0 0
      %352 = vmatpush1.bf16.msra.mxu0 0
      %353 = vmatprep.subr.bf16.mxu0 0
      %354 = vmatpush1.bf16.msra.mxu0 0
      %355 = vmatprep.subr.bf16.mxu0 0
      %356 = vmatpush1.bf16.msra.mxu0 0
      %357 = vmatprep.mubr.bf16.mxu0 0
      %358 = vmatmul.mubr.bf16.gmra.mrb[0].mxu0 %v320
      %v359 = vpop.f32.mrb[0].mxu0
      %v360 = vadd.f32 %v314, %v359
      %v361 = vpop.f32.mrb[0].mxu0
      %v362 = vpop.f32.mrb[0].mxu0
      %v363 = vpop.f32.mrb[0].mxu0
      %364 = vdwg.mxu0
      %s365 = scalar_lea.vmem %s1, 8
      %v366 = vld [vmem:[%s365] sm:$0xf]
      %367 = vrot.lane.b32.xlu0 %v263, 119
      %v368 = vpop.permute.xlu0 %367
      %369 = vrot.lane.b32.xlu0 %v264, 119
      %v370 = vpop.permute.xlu0 %369
      %vm371 = vcmask 973824
      %v372 = vsel %vm371, %v368, %v370
      %v374 = vsel %vm271, %v366, 0
      %v377 = vsel %vm275, %v372, 0
      %379 = vmatprep.subr.bf16.mxu0 0
      %380 = vmatpush1.bf16.msra.mxu0 %v377
      %381 = vmatprep.subr.bf16.mxu0 0
      %382 = vmatpush1.bf16.msra.mxu0 0
      %383 = vmatprep.subr.bf16.mxu0 0
      %384 = vmatpush1.bf16.msra.mxu0 0
      %385 = vmatprep.subr.bf16.mxu0 0
      %386 = vmatpush1.bf16.msra.mxu0 0
      %387 = vmatprep.subr.bf16.mxu0 0
      %388 = vmatpush1.bf16.msra.mxu0 0
      %389 = vmatprep.subr.bf16.mxu0 0
      %390 = vmatpush1.bf16.msra.mxu0 0
      %391 = vmatprep.subr.bf16.mxu0 0
      %392 = vmatpush1.bf16.msra.mxu0 0
      %393 = vmatprep.subr.bf16.mxu0 0
      %394 = vmatpush1.bf16.msra.mxu0 0
      %395 = vmatprep.subr.bf16.mxu0 0
      %396 = vmatpush1.bf16.msra.mxu0 0
      %397 = vmatprep.subr.bf16.mxu0 0
      %398 = vmatpush1.bf16.msra.mxu0 0
      %399 = vmatprep.subr.bf16.mxu0 0
      %400 = vmatpush1.bf16.msra.mxu0 0
      %401 = vmatprep.subr.bf16.mxu0 0
      %402 = vmatpush1.bf16.msra.mxu0 0
      %403 = vmatprep.subr.bf16.mxu0 0
      %404 = vmatpush1.bf16.msra.mxu0 0
      %405 = vmatprep.subr.bf16.mxu0 0
      %406 = vmatpush1.bf16.msra.mxu0 0
      %407 = vmatprep.subr.bf16.mxu0 0
      %408 = vmatpush1.bf16.msra.mxu0 0
      %409 = vmatprep.subr.bf16.mxu0 0
      %410 = vmatpush1.bf16.msra.mxu0 0
      %411 = vmatprep.mubr.bf16.mxu0 0
      %412 = vmatmul.mubr.bf16.gmra.mrb[0].mxu0 %v374
      %v413 = vpop.f32.mrb[0].mxu0
      %v414 = vadd.f32 0.0, %v413
      %v415 = vpop.f32.mrb[0].mxu0
      %v416 = vpop.f32.mrb[0].mxu0
      %v417 = vpop.f32.mrb[0].mxu0
      %418 = vdwg.mxu0
      %v419 = vadd.f32 %v360, %v414
      %s420 = scalar_lea.vmem %s1, 12
      %v421 = vld [vmem:[%s420] sm:$0xf]
      %422 = vrot.lane.b32.xlu0 %v263, 118
      %v423 = vpop.permute.xlu0 %422
      %424 = vrot.lane.b32.xlu0 %v264, 118
      %v425 = vpop.permute.xlu0 %424
      %vm426 = vcmask 965632
      %v427 = vsel %vm426, %v423, %v425
      %v429 = vsel %vm271, %v421, 0
      %v432 = vsel %vm275, %v427, 0
      %434 = vmatprep.subr.bf16.mxu0 0
      %435 = vmatpush1.bf16.msra.mxu0 %v432
      %436 = vmatprep.subr.bf16.mxu0 0
      %437 = vmatpush1.bf16.msra.mxu0 0
      %438 = vmatprep.subr.bf16.mxu0 0
      %439 = vmatpush1.bf16.msra.mxu0 0
      %440 = vmatprep.subr.bf16.mxu0 0
      %441 = vmatpush1.bf16.msra.mxu0 0
      %442 = vmatprep.subr.bf16.mxu0 0
      %443 = vmatpush1.bf16.msra.mxu0 0
      %444 = vmatprep.subr.bf16.mxu0 0
      %445 = vmatpush1.bf16.msra.mxu0 0
      %446 = vmatprep.subr.bf16.mxu0 0
      %447 = vmatpush1.bf16.msra.mxu0 0
      %448 = vmatprep.subr.bf16.mxu0 0
      %449 = vmatpush1.bf16.msra.mxu0 0
      %450 = vmatprep.subr.bf16.mxu0 0
      %451 = vmatpush1.bf16.msra.mxu0 0
      %452 = vmatprep.subr.bf16.mxu0 0
      %453 = vmatpush1.bf16.msra.mxu0 0
      %454 = vmatprep.subr.bf16.mxu0 0
      %455 = vmatpush1.bf16.msra.mxu0 0
      %456 = vmatprep.subr.bf16.mxu0 0
      %457 = vmatpush1.bf16.msra.mxu0 0
      %458 = vmatprep.subr.bf16.mxu0 0
      %459 = vmatpush1.bf16.msra.mxu0 0
      %460 = vmatprep.subr.bf16.mxu0 0
      %461 = vmatpush1.bf16.msra.mxu0 0
      %462 = vmatprep.subr.bf16.mxu0 0
      %463 = vmatpush1.bf16.msra.mxu0 0
      %464 = vmatprep.subr.bf16.mxu0 0
      %465 = vmatpush1.bf16.msra.mxu0 0
      %466 = vmatprep.mubr.bf16.mxu0 0
      %467 = vmatmul.mubr.bf16.gmra.mrb[0].mxu0 %v429
      %v468 = vpop.f32.mrb[0].mxu0
      %v469 = vadd.f32 0.0, %v468
      %v470 = vpop.f32.mrb[0].mxu0
      %v471 = vpop.f32.mrb[0].mxu0
      %v472 = vpop.f32.mrb[0].mxu0
      %473 = vdwg.mxu0
      %v474 = vadd.f32 %v419, %v469
      %s475 = scalar_lea.vmem %s246, 4
      %v476 = vld [vmem:[%s475] sm:$0xf]
      %s477 = scalar_lea.vmem %s1, 16
      %v478 = vld [vmem:[%s477] sm:$0xf]
      %v480 = vsel %vm271, %v478, 0
      %v483 = vsel %vm275, %v476, 0
      %485 = vmatprep.subr.bf16.mxu0 0
      %486 = vmatpush1.bf16.msra.mxu0 %v483
      %487 = vmatprep.subr.bf16.mxu0 0
      %488 = vmatpush1.bf16.msra.mxu0 0
      %489 = vmatprep.subr.bf16.mxu0 0
      %490 = vmatpush1.bf16.msra.mxu0 0
      %491 = vmatprep.subr.bf16.mxu0 0
      %492 = vmatpush1.bf16.msra.mxu0 0
      %493 = vmatprep.subr.bf16.mxu0 0
      %494 = vmatpush1.bf16.msra.mxu0 0
      %495 = vmatprep.subr.bf16.mxu0 0
      %496 = vmatpush1.bf16.msra.mxu0 0
      %497 = vmatprep.subr.bf16.mxu0 0
      %498 = vmatpush1.bf16.msra.mxu0 0
      %499 = vmatprep.subr.bf16.mxu0 0
      %500 = vmatpush1.bf16.msra.mxu0 0
      %501 = vmatprep.subr.bf16.mxu0 0
      %502 = vmatpush1.bf16.msra.mxu0 0
      %503 = vmatprep.subr.bf16.mxu0 0
      %504 = vmatpush1.bf16.msra.mxu0 0
      %505 = vmatprep.subr.bf16.mxu0 0
      %506 = vmatpush1.bf16.msra.mxu0 0
      %507 = vmatprep.subr.bf16.mxu0 0
      %508 = vmatpush1.bf16.msra.mxu0 0
      %509 = vmatprep.subr.bf16.mxu0 0
      %510 = vmatpush1.bf16.msra.mxu0 0
      %511 = vmatprep.subr.bf16.mxu0 0
      %512 = vmatpush1.bf16.msra.mxu0 0
      %513 = vmatprep.subr.bf16.mxu0 0
      %514 = vmatpush1.bf16.msra.mxu0 0
      %515 = vmatprep.subr.bf16.mxu0 0
      %516 = vmatpush1.bf16.msra.mxu0 0
      %517 = vmatprep.mubr.bf16.mxu0 0
      %518 = vmatmul.mubr.bf16.gmra.mrb[0].mxu0 %v480
      %v519 = vpop.f32.mrb[0].mxu0
      %v520 = vadd.f32 0.0, %v519
      %v521 = vpop.f32.mrb[0].mxu0
      %v522 = vpop.f32.mrb[0].mxu0
      %v523 = vpop.f32.mrb[0].mxu0
      %524 = vdwg.mxu0
      %v525 = vadd.f32 %v474, %v520
      %s526 = scalar_lea.vmem %s1, 20
      %v527 = vld [vmem:[%s526] sm:$0xf]
      %v530 = vunpack.c.l.s4 1983009808
      %v531 = vunpack.c.0.s8 %v530
      %v532 = vlaneseq
      %v533 = vshrl.u32 %v532, 7
      %v534 = vsub.s32 %v531, %v533
      %v535 = vrot.slane %v476, %v534
      %v536 = vcombine.high %v535, %v535
      %537 = vrot.lane.b32.xlu0 %v535, 127
      %v538 = vpop.permute.xlu0 %537
      %539 = vrot.lane.b32.xlu0 %v536, 127
      %v540 = vpop.permute.xlu0 %539
      %v541 = vsel %vm269, %v538, %v540
      %v543 = vsel %vm271, %v527, 0
      %v546 = vsel %vm275, %v541, 0
      %548 = vmatprep.subr.bf16.mxu0 0
      %549 = vmatpush1.bf16.msra.mxu0 %v546
      %550 = vmatprep.subr.bf16.mxu0 0
      %551 = vmatpush1.bf16.msra.mxu0 0
      %552 = vmatprep.subr.bf16.mxu0 0
      %553 = vmatpush1.bf16.msra.mxu0 0
      %554 = vmatprep.subr.bf16.mxu0 0
      %555 = vmatpush1.bf16.msra.mxu0 0
      %556 = vmatprep.subr.bf16.mxu0 0
      %557 = vmatpush1.bf16.msra.mxu0 0
      %558 = vmatprep.subr.bf16.mxu0 0
      %559 = vmatpush1.bf16.msra.mxu0 0
      %560 = vmatprep.subr.bf16.mxu0 0
      %561 = vmatpush1.bf16.msra.mxu0 0
      %562 = vmatprep.subr.bf16.mxu0 0
      %563 = vmatpush1.bf16.msra.mxu0 0
      %564 = vmatprep.subr.bf16.mxu0 0
      %565 = vmatpush1.bf16.msra.mxu0 0
      %566 = vmatprep.subr.bf16.mxu0 0
      %567 = vmatpush1.bf16.msra.mxu0 0
      %568 = vmatprep.subr.bf16.mxu0 0
      %569 = vmatpush1.bf16.msra.mxu0 0
      %570 = vmatprep.subr.bf16.mxu0 0
      %571 = vmatpush1.bf16.msra.mxu0 0
      %572 = vmatprep.subr.bf16.mxu0 0
      %573 = vmatpush1.bf16.msra.mxu0 0
      %574 = vmatprep.subr.bf16.mxu0 0
      %575 = vmatpush1.bf16.msra.mxu0 0
      %576 = vmatprep.subr.bf16.mxu0 0
      %577 = vmatpush1.bf16.msra.mxu0 0
      %578 = vmatprep.subr.bf16.mxu0 0
      %579 = vmatpush1.bf16.msra.mxu0 0
      %580 = vmatprep.mubr.bf16.mxu0 0
      %581 = vmatmul.mubr.bf16.gmra.mrb[0].mxu0 %v543
      %v582 = vpop.f32.mrb[0].mxu0
      %v583 = vadd.f32 0.0, %v582
      %v584 = vpop.f32.mrb[0].mxu0
      %v585 = vpop.f32.mrb[0].mxu0
      %v586 = vpop.f32.mrb[0].mxu0
      %587 = vdwg.mxu0
      %v588 = vadd.f32 %v525, %v583
      %s589 = scalar_lea.vmem %s1, 24
      %v590 = vld [vmem:[%s589] sm:$0xf]
      %591 = vrot.lane.b32.xlu0 %v535, 119
      %v592 = vpop.permute.xlu0 %591
      %593 = vrot.lane.b32.xlu0 %v536, 119
      %v594 = vpop.permute.xlu0 %593
      %v595 = vsel %vm371, %v592, %v594
      %v597 = vsel %vm271, %v590, 0
      %v600 = vsel %vm275, %v595, 0
      %602 = vmatprep.subr.bf16.mxu0 0
      %603 = vmatpush1.bf16.msra.mxu0 %v600
      %604 = vmatprep.subr.bf16.mxu0 0
      %605 = vmatpush1.bf16.msra.mxu0 0
      %606 = vmatprep.subr.bf16.mxu0 0
      %607 = vmatpush1.bf16.msra.mxu0 0
      %608 = vmatprep.subr.bf16.mxu0 0
      %609 = vmatpush1.bf16.msra.mxu0 0
      %610 = vmatprep.subr.bf16.mxu0 0
      %611 = vmatpush1.bf16.msra.mxu0 0
      %612 = vmatprep.subr.bf16.mxu0 0
      %613 = vmatpush1.bf16.msra.mxu0 0
      %614 = vmatprep.subr.bf16.mxu0 0
      %615 = vmatpush1.bf16.msra.mxu0 0
      %616 = vmatprep.subr.bf16.mxu0 0
      %617 = vmatpush1.bf16.msra.mxu0 0
      %618 = vmatprep.subr.bf16.mxu0 0
      %619 = vmatpush1.bf16.msra.mxu0 0
      %620 = vmatprep.subr.bf16.mxu0 0
      %621 = vmatpush1.bf16.msra.mxu0 0
      %622 = vmatprep.subr.bf16.mxu0 0
      %623 = vmatpush1.bf16.msra.mxu0 0
      %624 = vmatprep.subr.bf16.mxu0 0
      %625 = vmatpush1.bf16.msra.mxu0 0
      %626 = vmatprep.subr.bf16.mxu0 0
      %627 = vmatpush1.bf16.msra.mxu0 0
      %628 = vmatprep.subr.bf16.mxu0 0
      %629 = vmatpush1.bf16.msra.mxu0 0
      %630 = vmatprep.subr.bf16.mxu0 0
      %631 = vmatpush1.bf16.msra.mxu0 0
      %632 = vmatprep.subr.bf16.mxu0 0
      %633 = vmatpush1.bf16.msra.mxu0 0
      %634 = vmatprep.mubr.bf16.mxu0 0
      %635 = vmatmul.mubr.bf16.gmra.mrb[0].mxu0 %v597
      %v636 = vpop.f32.mrb[0].mxu0
      %v637 = vadd.f32 0.0, %v636
      %v638 = vpop.f32.mrb[0].mxu0
      %v639 = vpop.f32.mrb[0].mxu0
      %v640 = vpop.f32.mrb[0].mxu0
      %641 = vdwg.mxu0
      %v642 = vadd.f32 %v588, %v637
      %s643 = scalar_lea.vmem %s1, 28
      %v644 = vld [vmem:[%s643] sm:$0xf]
      %645 = vrot.lane.b32.xlu0 %v535, 118
      %v646 = vpop.permute.xlu0 %645
      %647 = vrot.lane.b32.xlu0 %v536, 118
      %v648 = vpop.permute.xlu0 %647
      %v649 = vsel %vm426, %v646, %v648
      %v651 = vsel %vm271, %v644, 0
      %v654 = vsel %vm275, %v649, 0
      %656 = vmatprep.subr.bf16.mxu0 0
      %657 = vmatpush1.bf16.msra.mxu0 %v654
      %658 = vmatprep.subr.bf16.mxu0 0
      %659 = vmatpush1.bf16.msra.mxu0 0
      %660 = vmatprep.subr.bf16.mxu0 0
      %661 = vmatpush1.bf16.msra.mxu0 0
      %662 = vmatprep.subr.bf16.mxu0 0
      %663 = vmatpush1.bf16.msra.mxu0 0
      %664 = vmatprep.subr.bf16.mxu0 0
      %665 = vmatpush1.bf16.msra.mxu0 0
      %666 = vmatprep.subr.bf16.mxu0 0
      %667 = vmatpush1.bf16.msra.mxu0 0
      %668 = vmatprep.subr.bf16.mxu0 0
      %669 = vmatpush1.bf16.msra.mxu0 0
      %670 = vmatprep.subr.bf16.mxu0 0
      %671 = vmatpush1.bf16.msra.mxu0 0
      %672 = vmatprep.subr.bf16.mxu0 0
      %673 = vmatpush1.bf16.msra.mxu0 0
      %674 = vmatprep.subr.bf16.mxu0 0
      %675 = vmatpush1.bf16.msra.mxu0 0
      %676 = vmatprep.subr.bf16.mxu0 0
      %677 = vmatpush1.bf16.msra.mxu0 0
      %678 = vmatprep.subr.bf16.mxu0 0
      %679 = vmatpush1.bf16.msra.mxu0 0
      %680 = vmatprep.subr.bf16.mxu0 0
      %681 = vmatpush1.bf16.msra.mxu0 0
      %682 = vmatprep.subr.bf16.mxu0 0
      %683 = vmatpush1.bf16.msra.mxu0 0
      %684 = vmatprep.subr.bf16.mxu0 0
      %685 = vmatpush1.bf16.msra.mxu0 0
      %686 = vmatprep.subr.bf16.mxu0 0
      %687 = vmatpush1.bf16.msra.mxu0 0
      %688 = vmatprep.mubr.bf16.mxu0 0
      %689 = vmatmul.mubr.bf16.gmra.mrb[0].mxu0 %v651
      %v690 = vpop.f32.mrb[0].mxu0
      %v691 = vadd.f32 0.0, %v690
      %v692 = vpop.f32.mrb[0].mxu0
      %v693 = vpop.f32.mrb[0].mxu0
      %v694 = vpop.f32.mrb[0].mxu0
      %695 = vdwg.mxu0
      %v696 = vadd.f32 %v642, %v691
      %s697 = scalar_lea.vmem %s246, 8
      %v698 = vld [vmem:[%s697] sm:$0xf]
      %s699 = scalar_lea.vmem %s1, 32
      %v700 = vld [vmem:[%s699] sm:$0xf]
      %v702 = vsel %vm271, %v700, 0
      %v705 = vsel %vm275, %v698, 0
      %707 = vmatprep.subr.bf16.mxu0 0
      %708 = vmatpush1.bf16.msra.mxu0 %v705
      %709 = vmatprep.subr.bf16.mxu0 0
      %710 = vmatpush1.bf16.msra.mxu0 0
      %711 = vmatprep.subr.bf16.mxu0 0
      %712 = vmatpush1.bf16.msra.mxu0 0
      %713 = vmatprep.subr.bf16.mxu0 0
      %714 = vmatpush1.bf16.msra.mxu0 0
      %715 = vmatprep.subr.bf16.mxu0 0
      %716 = vmatpush1.bf16.msra.mxu0 0
      %717 = vmatprep.subr.bf16.mxu0 0
      %718 = vmatpush1.bf16.msra.mxu0 0
      %719 = vmatprep.subr.bf16.mxu0 0
      %720 = vmatpush1.bf16.msra.mxu0 0
      %721 = vmatprep.subr.bf16.mxu0 0
      %722 = vmatpush1.bf16.msra.mxu0 0
      %723 = vmatprep.subr.bf16.mxu0 0
      %724 = vmatpush1.bf16.msra.mxu0 0
      %725 = vmatprep.subr.bf16.mxu0 0
      %726 = vmatpush1.bf16.msra.mxu0 0
      %727 = vmatprep.subr.bf16.mxu0 0
      %728 = vmatpush1.bf16.msra.mxu0 0
      %729 = vmatprep.subr.bf16.mxu0 0
      %730 = vmatpush1.bf16.msra.mxu0 0
      %731 = vmatprep.subr.bf16.mxu0 0
      %732 = vmatpush1.bf16.msra.mxu0 0
      %733 = vmatprep.subr.bf16.mxu0 0
      %734 = vmatpush1.bf16.msra.mxu0 0
      %735 = vmatprep.subr.bf16.mxu0 0
      %736 = vmatpush1.bf16.msra.mxu0 0
      %737 = vmatprep.subr.bf16.mxu0 0
      %738 = vmatpush1.bf16.msra.mxu0 0
      %739 = vmatprep.mubr.bf16.mxu0 0
      %740 = vmatmul.mubr.bf16.gmra.mrb[0].mxu0 %v702
      %v741 = vpop.f32.mrb[0].mxu0
      %v742 = vadd.f32 0.0, %v741
      %v743 = vpop.f32.mrb[0].mxu0
      %v744 = vpop.f32.mrb[0].mxu0
      %v745 = vpop.f32.mrb[0].mxu0
      %746 = vdwg.mxu0
      %v747 = vadd.f32 %v696, %v742
      %s748 = scalar_lea.vmem %s1, 36
      %v749 = vld [vmem:[%s748] sm:$0xf]
      %v752 = vunpack.c.l.s4 1983009808
      %v753 = vunpack.c.0.s8 %v752
      %v754 = vlaneseq
      %v755 = vshrl.u32 %v754, 7
      %v756 = vsub.s32 %v753, %v755
      %v757 = vrot.slane %v698, %v756
      %v758 = vcombine.high %v757, %v757
      %759 = vrot.lane.b32.xlu0 %v757, 127
      %v760 = vpop.permute.xlu0 %759
      %761 = vrot.lane.b32.xlu0 %v758, 127
      %v762 = vpop.permute.xlu0 %761
      %v763 = vsel %vm269, %v760, %v762
      %v765 = vsel %vm271, %v749, 0
      %v768 = vsel %vm275, %v763, 0
      %770 = vmatprep.subr.bf16.mxu0 0
      %771 = vmatpush1.bf16.msra.mxu0 %v768
      %772 = vmatprep.subr.bf16.mxu0 0
      %773 = vmatpush1.bf16.msra.mxu0 0
      %774 = vmatprep.subr.bf16.mxu0 0
      %775 = vmatpush1.bf16.msra.mxu0 0
      %776 = vmatprep.subr.bf16.mxu0 0
      %777 = vmatpush1.bf16.msra.mxu0 0
      %778 = vmatprep.subr.bf16.mxu0 0
      %779 = vmatpush1.bf16.msra.mxu0 0
      %780 = vmatprep.subr.bf16.mxu0 0
      %781 = vmatpush1.bf16.msra.mxu0 0
      %782 = vmatprep.subr.bf16.mxu0 0
      %783 = vmatpush1.bf16.msra.mxu0 0
      %784 = vmatprep.subr.bf16.mxu0 0
      %785 = vmatpush1.bf16.msra.mxu0 0
      %786 = vmatprep.subr.bf16.mxu0 0
      %787 = vmatpush1.bf16.msra.mxu0 0
      %788 = vmatprep.subr.bf16.mxu0 0
      %789 = vmatpush1.bf16.msra.mxu0 0
      %790 = vmatprep.subr.bf16.mxu0 0
      %791 = vmatpush1.bf16.msra.mxu0 0
      %792 = vmatprep.subr.bf16.mxu0 0
      %793 = vmatpush1.bf16.msra.mxu0 0
      %794 = vmatprep.subr.bf16.mxu0 0
      %795 = vmatpush1.bf16.msra.mxu0 0
      %796 = vmatprep.subr.bf16.mxu0 0
      %797 = vmatpush1.bf16.msra.mxu0 0
      %798 = vmatprep.subr.bf16.mxu0 0
      %799 = vmatpush1.bf16.msra.mxu0 0
      %800 = vmatprep.subr.bf16.mxu0 0
      %801 = vmatpush1.bf16.msra.mxu0 0
      %802 = vmatprep.mubr.bf16.mxu0 0
      %803 = vmatmul.mubr.bf16.gmra.mrb[0].mxu0 %v765
      %v804 = vpop.f32.mrb[0].mxu0
      %v805 = vadd.f32 0.0, %v804
      %v806 = vpop.f32.mrb[0].mxu0
      %v807 = vpop.f32.mrb[0].mxu0
      %v808 = vpop.f32.mrb[0].mxu0
      %809 = vdwg.mxu0
      %v810 = vadd.f32 %v747, %v805
      %s811 = scalar_lea.vmem %s1, 40
      %v812 = vld [vmem:[%s811] sm:$0xf]
      %813 = vrot.lane.b32.xlu0 %v757, 119
      %v814 = vpop.permute.xlu0 %813
      %815 = vrot.lane.b32.xlu0 %v758, 119
      %v816 = vpop.permute.xlu0 %815
      %v817 = vsel %vm371, %v814, %v816
      %v819 = vsel %vm271, %v812, 0
      %v822 = vsel %vm275, %v817, 0
      %824 = vmatprep.subr.bf16.mxu0 0
      %825 = vmatpush1.bf16.msra.mxu0 %v822
      %826 = vmatprep.subr.bf16.mxu0 0
      %827 = vmatpush1.bf16.msra.mxu0 0
      %828 = vmatprep.subr.bf16.mxu0 0
      %829 = vmatpush1.bf16.msra.mxu0 0
      %830 = vmatprep.subr.bf16.mxu0 0
      %831 = vmatpush1.bf16.msra.mxu0 0
      %832 = vmatprep.subr.bf16.mxu0 0
      %833 = vmatpush1.bf16.msra.mxu0 0
      %834 = vmatprep.subr.bf16.mxu0 0
      %835 = vmatpush1.bf16.msra.mxu0 0
      %836 = vmatprep.subr.bf16.mxu0 0
      %837 = vmatpush1.bf16.msra.mxu0 0
      %838 = vmatprep.subr.bf16.mxu0 0
      %839 = vmatpush1.bf16.msra.mxu0 0
      %840 = vmatprep.subr.bf16.mxu0 0
      %841 = vmatpush1.bf16.msra.mxu0 0
      %842 = vmatprep.subr.bf16.mxu0 0
      %843 = vmatpush1.bf16.msra.mxu0 0
      %844 = vmatprep.subr.bf16.mxu0 0
      %845 = vmatpush1.bf16.msra.mxu0 0
      %846 = vmatprep.subr.bf16.mxu0 0
      %847 = vmatpush1.bf16.msra.mxu0 0
      %848 = vmatprep.subr.bf16.mxu0 0
      %849 = vmatpush1.bf16.msra.mxu0 0
      %850 = vmatprep.subr.bf16.mxu0 0
      %851 = vmatpush1.bf16.msra.mxu0 0
      %852 = vmatprep.subr.bf16.mxu0 0
      %853 = vmatpush1.bf16.msra.mxu0 0
      %854 = vmatprep.subr.bf16.mxu0 0
      %855 = vmatpush1.bf16.msra.mxu0 0
      %856 = vmatprep.mubr.bf16.mxu0 0
      %857 = vmatmul.mubr.bf16.gmra.mrb[0].mxu0 %v819
      %v858 = vpop.f32.mrb[0].mxu0
      %v859 = vadd.f32 0.0, %v858
      %v860 = vpop.f32.mrb[0].mxu0
      %v861 = vpop.f32.mrb[0].mxu0
      %v862 = vpop.f32.mrb[0].mxu0
      %863 = vdwg.mxu0
      %v864 = vadd.f32 %v810, %v859
      %s865 = scalar_lea.vmem %s1, 44
      %v866 = vld [vmem:[%s865] sm:$0xf]
      %867 = vrot.lane.b32.xlu0 %v757, 118
      %v868 = vpop.permute.xlu0 %867
      %869 = vrot.lane.b32.xlu0 %v758, 118
      %v870 = vpop.permute.xlu0 %869
      %v871 = vsel %vm426, %v868, %v870
      %v873 = vsel %vm271, %v866, 0
      %v876 = vsel %vm275, %v871, 0
      %878 = vmatprep.subr.bf16.mxu0 0
      %879 = vmatpush1.bf16.msra.mxu0 %v876
      %880 = vmatprep.subr.bf16.mxu0 0
      %881 = vmatpush1.bf16.msra.mxu0 0
      %882 = vmatprep.subr.bf16.mxu0 0
      %883 = vmatpush1.bf16.msra.mxu0 0
      %884 = vmatprep.subr.bf16.mxu0 0
      %885 = vmatpush1.bf16.msra.mxu0 0
      %886 = vmatprep.subr.bf16.mxu0 0
      %887 = vmatpush1.bf16.msra.mxu0 0
      %888 = vmatprep.subr.bf16.mxu0 0
      %889 = vmatpush1.bf16.msra.mxu0 0
      %890 = vmatprep.subr.bf16.mxu0 0
      %891 = vmatpush1.bf16.msra.mxu0 0
      %892 = vmatprep.subr.bf16.mxu0 0
      %893 = vmatpush1.bf16.msra.mxu0 0
      %894 = vmatprep.subr.bf16.mxu0 0
      %895 = vmatpush1.bf16.msra.mxu0 0
      %896 = vmatprep.subr.bf16.mxu0 0
      %897 = vmatpush1.bf16.msra.mxu0 0
      %898 = vmatprep.subr.bf16.mxu0 0
      %899 = vmatpush1.bf16.msra.mxu0 0
      %900 = vmatprep.subr.bf16.mxu0 0
      %901 = vmatpush1.bf16.msra.mxu0 0
      %902 = vmatprep.subr.bf16.mxu0 0
      %903 = vmatpush1.bf16.msra.mxu0 0
      %904 = vmatprep.subr.bf16.mxu0 0
      %905 = vmatpush1.bf16.msra.mxu0 0
      %906 = vmatprep.subr.bf16.mxu0 0
      %907 = vmatpush1.bf16.msra.mxu0 0
      %908 = vmatprep.subr.bf16.mxu0 0
      %909 = vmatpush1.bf16.msra.mxu0 0
      %910 = vmatprep.mubr.bf16.mxu0 0
      %911 = vmatmul.mubr.bf16.gmra.mrb[0].mxu0 %v873
      %v912 = vpop.f32.mrb[0].mxu0
      %v913 = vadd.f32 0.0, %v912
      %v914 = vpop.f32.mrb[0].mxu0
      %v915 = vpop.f32.mrb[0].mxu0
      %v916 = vpop.f32.mrb[0].mxu0
      %917 = vdwg.mxu0
      %v918 = vadd.f32 %v864, %v913
      %s919 = scalar_lea.vmem %s246, 12
      %v920 = vld [vmem:[%s919] sm:$0xf]
      %s921 = scalar_lea.vmem %s1, 48
      %v922 = vld [vmem:[%s921] sm:$0xf]
      %v924 = vsel %vm271, %v922, 0
      %v927 = vsel %vm275, %v920, 0
      %929 = vmatprep.subr.bf16.mxu0 0
      %930 = vmatpush1.bf16.msra.mxu0 %v927
      %931 = vmatprep.subr.bf16.mxu0 0
      %932 = vmatpush1.bf16.msra.mxu0 0
      %933 = vmatprep.subr.bf16.mxu0 0
      %934 = vmatpush1.bf16.msra.mxu0 0
      %935 = vmatprep.subr.bf16.mxu0 0
      %936 = vmatpush1.bf16.msra.mxu0 0
      %937 = vmatprep.subr.bf16.mxu0 0
      %938 = vmatpush1.bf16.msra.mxu0 0
      %939 = vmatprep.subr.bf16.mxu0 0
      %940 = vmatpush1.bf16.msra.mxu0 0
      %941 = vmatprep.subr.bf16.mxu0 0
      %942 = vmatpush1.bf16.msra.mxu0 0
      %943 = vmatprep.subr.bf16.mxu0 0
      %944 = vmatpush1.bf16.msra.mxu0 0
      %945 = vmatprep.subr.bf16.mxu0 0
      %946 = vmatpush1.bf16.msra.mxu0 0
      %947 = vmatprep.subr.bf16.mxu0 0
      %948 = vmatpush1.bf16.msra.mxu0 0
      %949 = vmatprep.subr.bf16.mxu0 0
      %950 = vmatpush1.bf16.msra.mxu0 0
      %951 = vmatprep.subr.bf16.mxu0 0
      %952 = vmatpush1.bf16.msra.mxu0 0
      %953 = vmatprep.subr.bf16.mxu0 0
      %954 = vmatpush1.bf16.msra.mxu0 0
      %955 = vmatprep.subr.bf16.mxu0 0
      %956 = vmatpush1.bf16.msra.mxu0 0
      %957 = vmatprep.subr.bf16.mxu0 0
      %958 = vmatpush1.bf16.msra.mxu0 0
      %959 = vmatprep.subr.bf16.mxu0 0
      %960 = vmatpush1.bf16.msra.mxu0 0
      %961 = vmatprep.mubr.bf16.mxu0 0
      %962 = vmatmul.mubr.bf16.gmra.mrb[0].mxu0 %v924
      %v963 = vpop.f32.mrb[0].mxu0
      %v964 = vadd.f32 0.0, %v963
      %v965 = vpop.f32.mrb[0].mxu0
      %v966 = vpop.f32.mrb[0].mxu0
      %v967 = vpop.f32.mrb[0].mxu0
      %968 = vdwg.mxu0
      %v969 = vadd.f32 %v918, %v964
      %s970 = scalar_lea.vmem %s1, 52
      %v971 = vld [vmem:[%s970] sm:$0xf]
      %v974 = vunpack.c.l.s4 1983009808
      %v975 = vunpack.c.0.s8 %v974
      %v976 = vlaneseq
      %v977 = vshrl.u32 %v976, 7
      %v978 = vsub.s32 %v975, %v977
      %v979 = vrot.slane %v920, %v978
      %v980 = vcombine.high %v979, %v979
      %981 = vrot.lane.b32.xlu0 %v979, 127
      %v982 = vpop.permute.xlu0 %981
      %983 = vrot.lane.b32.xlu0 %v980, 127
      %v984 = vpop.permute.xlu0 %983
      %v985 = vsel %vm269, %v982, %v984
      %v987 = vsel %vm271, %v971, 0
      %v990 = vsel %vm275, %v985, 0
      %992 = vmatprep.subr.bf16.mxu0 0
      %993 = vmatpush1.bf16.msra.mxu0 %v990
      %994 = vmatprep.subr.bf16.mxu0 0
      %995 = vmatpush1.bf16.msra.mxu0 0
      %996 = vmatprep.subr.bf16.mxu0 0
      %997 = vmatpush1.bf16.msra.mxu0 0
      %998 = vmatprep.subr.bf16.mxu0 0
      %999 = vmatpush1.bf16.msra.mxu0 0
      %1000 = vmatprep.subr.bf16.mxu0 0
      %1001 = vmatpush1.bf16.msra.mxu0 0
      %1002 = vmatprep.subr.bf16.mxu0 0
      %1003 = vmatpush1.bf16.msra.mxu0 0
      %1004 = vmatprep.subr.bf16.mxu0 0
      %1005 = vmatpush1.bf16.msra.mxu0 0
      %1006 = vmatprep.subr.bf16.mxu0 0
      %1007 = vmatpush1.bf16.msra.mxu0 0
      %1008 = vmatprep.subr.bf16.mxu0 0
      %1009 = vmatpush1.bf16.msra.mxu0 0
      %1010 = vmatprep.subr.bf16.mxu0 0
      %1011 = vmatpush1.bf16.msra.mxu0 0
      %1012 = vmatprep.subr.bf16.mxu0 0
      %1013 = vmatpush1.bf16.msra.mxu0 0
      %1014 = vmatprep.subr.bf16.mxu0 0
      %1015 = vmatpush1.bf16.msra.mxu0 0
      %1016 = vmatprep.subr.bf16.mxu0 0
      %1017 = vmatpush1.bf16.msra.mxu0 0
      %1018 = vmatprep.subr.bf16.mxu0 0
      %1019 = vmatpush1.bf16.msra.mxu0 0
      %1020 = vmatprep.subr.bf16.mxu0 0
      %1021 = vmatpush1.bf16.msra.mxu0 0
      %1022 = vmatprep.subr.bf16.mxu0 0
      %1023 = vmatpush1.bf16.msra.mxu0 0
      %1024 = vmatprep.mubr.bf16.mxu0 0
      %1025 = vmatmul.mubr.bf16.gmra.mrb[0].mxu0 %v987
      %v1026 = vpop.f32.mrb[0].mxu0
      %v1027 = vadd.f32 0.0, %v1026
      %v1028 = vpop.f32.mrb[0].mxu0
      %v1029 = vpop.f32.mrb[0].mxu0
      %v1030 = vpop.f32.mrb[0].mxu0
      %1031 = vdwg.mxu0
      %v1032 = vadd.f32 %v969, %v1027
      %s1033 = scalar_lea.vmem %s1, 56
      %v1034 = vld [vmem:[%s1033] sm:$0xf]
      %1035 = vrot.lane.b32.xlu0 %v979, 119
      %v1036 = vpop.permute.xlu0 %1035
      %1037 = vrot.lane.b32.xlu0 %v980, 119
      %v1038 = vpop.permute.xlu0 %1037
      %v1039 = vsel %vm371, %v1036, %v1038
      %v1041 = vsel %vm271, %v1034, 0
      %v1044 = vsel %vm275, %v1039, 0
      %1046 = vmatprep.subr.bf16.mxu0 0
      %1047 = vmatpush1.bf16.msra.mxu0 %v1044
      %1048 = vmatprep.subr.bf16.mxu0 0
      %1049 = vmatpush1.bf16.msra.mxu0 0
      %1050 = vmatprep.subr.bf16.mxu0 0
      %1051 = vmatpush1.bf16.msra.mxu0 0
      %1052 = vmatprep.subr.bf16.mxu0 0
      %1053 = vmatpush1.bf16.msra.mxu0 0
      %1054 = vmatprep.subr.bf16.mxu0 0
      %1055 = vmatpush1.bf16.msra.mxu0 0
      %1056 = vmatprep.subr.bf16.mxu0 0
      %1057 = vmatpush1.bf16.msra.mxu0 0
      %1058 = vmatprep.subr.bf16.mxu0 0
      %1059 = vmatpush1.bf16.msra.mxu0 0
      %1060 = vmatprep.subr.bf16.mxu0 0
      %1061 = vmatpush1.bf16.msra.mxu0 0
      %1062 = vmatprep.subr.bf16.mxu0 0
      %1063 = vmatpush1.bf16.msra.mxu0 0
      %1064 = vmatprep.subr.bf16.mxu0 0
      %1065 = vmatpush1.bf16.msra.mxu0 0
      %1066 = vmatprep.subr.bf16.mxu0 0
      %1067 = vmatpush1.bf16.msra.mxu0 0
      %1068 = vmatprep.subr.bf16.mxu0 0
      %1069 = vmatpush1.bf16.msra.mxu0 0
      %1070 = vmatprep.subr.bf16.mxu0 0
      %1071 = vmatpush1.bf16.msra.mxu0 0
      %1072 = vmatprep.subr.bf16.mxu0 0
      %1073 = vmatpush1.bf16.msra.mxu0 0
      %1074 = vmatprep.subr.bf16.mxu0 0
      %1075 = vmatpush1.bf16.msra.mxu0 0
      %1076 = vmatprep.subr.bf16.mxu0 0
      %1077 = vmatpush1.bf16.msra.mxu0 0
      %1078 = vmatprep.mubr.bf16.mxu0 0
      %1079 = vmatmul.mubr.bf16.gmra.mrb[0].mxu0 %v1041
      %v1080 = vpop.f32.mrb[0].mxu0
      %v1081 = vadd.f32 0.0, %v1080
      %v1082 = vpop.f32.mrb[0].mxu0
      %v1083 = vpop.f32.mrb[0].mxu0
      %v1084 = vpop.f32.mrb[0].mxu0
      %1085 = vdwg.mxu0
      %v1086 = vadd.f32 %v1032, %v1081
      %s1087 = scalar_lea.vmem %s1, 60
      %v1088 = vld [vmem:[%s1087] sm:$0xf]
      %1089 = vrot.lane.b32.xlu0 %v979, 118
      %v1090 = vpop.permute.xlu0 %1089
      %1091 = vrot.lane.b32.xlu0 %v980, 118
      %v1092 = vpop.permute.xlu0 %1091
      %v1093 = vsel %vm426, %v1090, %v1092
      %v1095 = vsel %vm271, %v1088, 0
      %v1098 = vsel %vm275, %v1093, 0
      %1100 = vmatprep.subr.bf16.mxu0 0
      %1101 = vmatpush1.bf16.msra.mxu0 %v1098
      %1102 = vmatprep.subr.bf16.mxu0 0
      %1103 = vmatpush1.bf16.msra.mxu0 0
      %1104 = vmatprep.subr.bf16.mxu0 0
      %1105 = vmatpush1.bf16.msra.mxu0 0
      %1106 = vmatprep.subr.bf16.mxu0 0
      %1107 = vmatpush1.bf16.msra.mxu0 0
      %1108 = vmatprep.subr.bf16.mxu0 0
      %1109 = vmatpush1.bf16.msra.mxu0 0
      %1110 = vmatprep.subr.bf16.mxu0 0
      %1111 = vmatpush1.bf16.msra.mxu0 0
      %1112 = vmatprep.subr.bf16.mxu0 0
      %1113 = vmatpush1.bf16.msra.mxu0 0
      %1114 = vmatprep.subr.bf16.mxu0 0
      %1115 = vmatpush1.bf16.msra.mxu0 0
      %1116 = vmatprep.subr.bf16.mxu0 0
      %1117 = vmatpush1.bf16.msra.mxu0 0
      %1118 = vmatprep.subr.bf16.mxu0 0
      %1119 = vmatpush1.bf16.msra.mxu0 0
      %1120 = vmatprep.subr.bf16.mxu0 0
      %1121 = vmatpush1.bf16.msra.mxu0 0
      %1122 = vmatprep.subr.bf16.mxu0 0
      %1123 = vmatpush1.bf16.msra.mxu0 0
      %1124 = vmatprep.subr.bf16.mxu0 0
      %1125 = vmatpush1.bf16.msra.mxu0 0
      %1126 = vmatprep.subr.bf16.mxu0 0
      %1127 = vmatpush1.bf16.msra.mxu0 0
      %1128 = vmatprep.subr.bf16.mxu0 0
      %1129 = vmatpush1.bf16.msra.mxu0 0
      %1130 = vmatprep.subr.bf16.mxu0 0
      %1131 = vmatpush1.bf16.msra.mxu0 0
      %1132 = vmatprep.mubr.bf16.mxu0 0
      %1133 = vmatmul.mubr.bf16.gmra.mrb[0].mxu0 %v1095
      %v1134 = vpop.f32.mrb[0].mxu0
      %v1135 = vadd.f32 0.0, %v1134
      %v1136 = vpop.f32.mrb[0].mxu0
      %v1137 = vpop.f32.mrb[0].mxu0
      %v1138 = vpop.f32.mrb[0].mxu0
      %1139 = vdwg.mxu0
      %v1140 = vadd.f32 %v1086, %v1135
      %v1141 = vld [vmem:[%s2] sm:$0x1]
      %v1143 = vlaneseq
      %v1144 = vshrl.u32 %v1143, 7
      %v1145 = vsub.s32 0, %v1144
      %v1146 = vrot.slane %v1141, %v1145
      %v1148 = vmul.f32 %v1140, %v1146
      %1149 = vadd.xlane.f32.xlu0 %v1148
      %v1150 = vpop.xlane.xlu0 %1149
      %v1151 = vmul.f32 %v1150, 0.015625
      %v1152 = vsub.f32 %v1140, %v1151
      %v1153 = vmul.f32 %v1152, %v1146
      %v1154 = vmul.f32 %v1153, %v1153
      %1155 = vadd.xlane.f32.xlu0 %v1154
      %v1156 = vpop.xlane.xlu0 %1155
      %v1157 = vmul.f32 %v1156, 0.015625
      %v1158 = vld [vmem:[%s3] sm:$0xff]
      %v1159 = vadd.f32 %v1157, 1e-05
      %v1160 = vrsqrt.pop %v1159
      %v1161 = vmul.f32 %v1158, %v1160
      %v1162 = vld [vmem:[%s4] sm:$0xff]
      %v1163 = vmul.f32 %v1151, %v1161
      %v1164 = vsub.f32 %v1162, %v1163
      %1166 = vset.pattern.permute.xlu0 0
      %1167 = vperm.xlu0 %1166, %v1161
      %v1168 = vpop.permute.xlu0 %1167
      %v1170 = vmul.f32 %v1140, %v1168
      %1172 = vset.pattern.permute.xlu0 0
      %1173 = vperm.xlu0 %1172, %v1164
      %v1174 = vpop.permute.xlu0 %1173
      %v1176 = vadd.f32 %v1170, %v1174
      %s1177 = sld [smem:[#allocation2]]
      %vm1178 = vcmp.ge.f32.partialorder %v1176, 0.0
      %v1179 = vstv %s1177
      %v1180 = vmul.f32 %v1179, %v1176
      %v1181 = vsel %vm1178, %v1176, %v1180
      %1182 = vst [vmem:[%s250] sm:$0xff] %v1181
      %p1183 = scmp.lt.s32.totalorder %s18, 1
      %s1184 = scalar_select %p1183, %s18, 1
      %s1185 = smul.addr %s1184, 8
      %s1186 = scalar_lea.vmem %s6, %s1185
      // Predicated region
      $region45: #{block_forward.1} parent=43 // pred_check
        %p1187 = pneg %p167
      $region46: #{block_forward.1} parent=43 // pred_check_branch
        %1189 = sbr.rel (%p1187) target = $region48
      $region47: #{block_forward.1} parent=43 // pred_region
        _
      $region48: #{block_forward.1} parent=43 // pred_fallthru
        _
    $region44: #{block_forward.1} parent=5 // pred_fallthru
      _
    %p1190 = scmp.le.s32.totalorder 2, %s13
    // Predicated region
    $region49: #{block_forward.1} parent=5 // pred_check
      %p1191 = pneg %p1190
    $region50: #{block_forward.1} parent=5 // pred_check_branch
      %1193 = sbr.rel (%p1191) target = $region52
    $region51: #{block_forward.1} parent=5 // pred_region
      %s1194 = ssub.s32 %s13, 2
      // Predicated region
      $region53: #{block_forward.1} parent=51 // pred_check
        %p1195 = pneg %p173
      $region54: #{block_forward.1} parent=51 // pred_check_branch
        %1197 = sbr.rel (%p1195) target = $region56
      $region55: #{block_forward.1} parent=51 // pred_region
        %p1198 = scmp.lt.s32.totalorder %s19, 1
        %s1199 = scalar_select %p1198, %s19, 1
        %s1200 = smul.addr %s1199, 8
        %s1201 = scalar_lea.vmem %s6, %s1200
      $region56: #{block_forward.1} parent=51 // pred_fallthru
        _
    $region52: #{block_forward.1} parent=5 // pred_fallthru
      _
  $region6: #{block_forward.1} parent=0 // loop_footer
    %s17 = sadd.s32 1, %s13
  $region7: #{block_forward.1} parent=0 // loop_footer_branch
    %12 = sbr.rel target = $region3
  $region8: #{block_forward.1} parent=0 // loop_exit
    _

</llo_original>
